<compile_context>
chip_gen: v5e
topology: v5e:2x2
jax: 0.10.0
libtpu: 0.0.40
codegen_flags: <defaults>
</compile_context>

<pallas_src>
import math
import functools

import jax
import jax.numpy as jnp
from jax import lax
from jax.experimental import pallas as pl
from jax.experimental.pallas import tpu as pltpu

_LN_EPS = 1e-12            # BertLayerNorm eps
_INV_SQRT2 = 0.7071067811865475


def _layer_norm(x, gamma, beta):
    # BertLayerNorm: biased variance, eps inside the sqrt; rsqrt keeps work on the EUP.
    u = jnp.mean(x, axis=-1, keepdims=True)
    xc = x - u
    s = jnp.mean(xc * xc, axis=-1, keepdims=True)
    return xc * lax.rsqrt(s + _LN_EPS) * gamma + beta


def _gelu_erf(x):
    # torch-style erf GeLU with 1/sqrt(2) folded into a multiply.
    return x * 0.5 * (1.0 + lax.erf(x * _INV_SQRT2))


def _bert_layer_kernel(x_ref, mask_ref,
                       wq_ref, bq_ref, wk_ref, bk_ref, wv_ref, bv_ref,
                       wo_ref, bo_ref, g1_ref, b1_ref,
                       wi_ref, bi_ref, wd_ref, bd_ref, g2_ref, b2_ref,
                       o_ref, *, num_heads):
    f32 = jnp.float32
    x = x_ref[0]                                  # [S, H] native dtype (MXU input)
    mask = mask_ref[0].astype(f32)                # [1, S] additive attention mask

    # --- BertSelfAttention --------------------------------------------------
    q = jnp.dot(x, wq_ref[...], preferred_element_type=f32) + bq_ref[...]
    k = jnp.dot(x, wk_ref[...], preferred_element_type=f32) + bk_ref[...]
    v = jnp.dot(x, wv_ref[...], preferred_element_type=f32) + bv_ref[...]

    S, H = x.shape
    d = H // num_heads
    inv_sqrt_d = 1.0 / math.sqrt(d)

    ctx_heads = []
    for h in range(num_heads):                    # static unroll over heads
        sl = slice(h * d, (h + 1) * d)
        q_h, k_h, v_h = q[:, sl], k[:, sl], v[:, sl]
        s_h = jnp.dot(q_h, k_h.T, preferred_element_type=f32) * inv_sqrt_d
        s_h = s_h + mask                          # [S, S] + [1, S]
        s_h = s_h - jnp.max(s_h, axis=-1, keepdims=True)
        e_h = jnp.exp(s_h)
        p_h = e_h / jnp.sum(e_h, axis=-1, keepdims=True)
        # TODO(synk): attention-prob dropout & head_mask are identity (eval mode / None).
        ctx_heads.append(jnp.dot(p_h, v_h, preferred_element_type=f32))
    ctx = jnp.concatenate(ctx_heads, axis=-1)     # [S, H]

    # --- BertSelfOutput: dense + residual + LayerNorm -----------------------
    attn = jnp.dot(ctx.astype(x.dtype), wo_ref[...],
                   preferred_element_type=f32) + bo_ref[...]
    h1 = _layer_norm(attn + x.astype(f32), g1_ref[...], b1_ref[...])

    # --- BertIntermediate: dense + GeLU(erf) ---------------------------------
    inter = jnp.dot(h1.astype(x.dtype), wi_ref[...],
                    preferred_element_type=f32) + bi_ref[...]
    inter = _gelu_erf(inter)

    # --- BertOutput: dense + residual + LayerNorm ----------------------------
    out = jnp.dot(inter.astype(x.dtype), wd_ref[...],
                  preferred_element_type=f32) + bd_ref[...]
    h2 = _layer_norm(out + h1, g2_ref[...], b2_ref[...])

    o_ref[0] = h2.astype(o_ref.dtype)


def bert_layer(x, mask, p, *, num_heads):
    """One fused BertLayer.  x: [B,S,H]; mask: [B,1,S] additive; p: dict of params."""
    B, S, H = x.shape
    I = p["wi"].shape[1]

    def batch_map(b):
        return (b, 0, 0)

    def const2(b):
        return (0, 0)

    in_specs = [
        pl.BlockSpec((1, S, H), batch_map),                                  # hidden states
        pl.BlockSpec((1, 1, S), batch_map),                                  # additive mask
        pl.BlockSpec((H, H), const2), pl.BlockSpec((1, H), const2),          # Wq, bq
        pl.BlockSpec((H, H), const2), pl.BlockSpec((1, H), const2),          # Wk, bk
        pl.BlockSpec((H, H), const2), pl.BlockSpec((1, H), const2),          # Wv, bv
        pl.BlockSpec((H, H), const2), pl.BlockSpec((1, H), const2),          # attn out dense
        pl.BlockSpec((1, H), const2), pl.BlockSpec((1, H), const2),          # LN1 gamma/beta
        pl.BlockSpec((H, I), const2), pl.BlockSpec((1, I), const2),          # intermediate dense
        pl.BlockSpec((I, H), const2), pl.BlockSpec((1, H), const2),          # output dense
        pl.BlockSpec((1, H), const2), pl.BlockSpec((1, H), const2),          # LN2 gamma/beta
    ]

    return pl.pallas_call(
        functools.partial(_bert_layer_kernel, num_heads=num_heads),
        out_shape=jax.ShapeDtypeStruct((B, S, H), x.dtype),
        grid_spec=pltpu.PrefetchScalarGridSpec(
            num_scalar_prefetch=0,
            grid=(B,),                     # >= 2 parallel steps -> both v7x TCs busy
            in_specs=in_specs,
            out_specs=pl.BlockSpec((1, S, H), batch_map),
        ),
        compiler_params=pltpu.CompilerParams(
            dimension_semantics=("parallel",),
        ),
    )(x, mask,
      p["wq"], p["bq"], p["wk"], p["bk"], p["wv"], p["bv"],
      p["wo"], p["bo"], p["g1"], p["b1"],
      p["wi"], p["bi"], p["wd"], p["bd"], p["g2"], p["b2"])


def bert_encoder(hidden_states, attention_mask, layer_params, *, num_heads):
    # TODO(synk): output_hidden_states / output_attentions collection not implemented;
    # only the final hidden states (default BertEncoder output) are returned.
    for p in layer_params:
        hidden_states = bert_layer(hidden_states, attention_mask, p, num_heads=num_heads)
    return hidden_states


# ----------------------------- pure-JAX reference -----------------------------
def _reference_layer(x, mask, p, num_heads):
    f32 = jnp.float32
    x = x.astype(f32)
    B, S, H = x.shape
    d = H // num_heads
    q = x @ p["wq"] + p["bq"]
    k = x @ p["wk"] + p["bk"]
    v = x @ p["wv"] + p["bv"]
    split = lambda t: t.reshape(B, S, num_heads, d).transpose(0, 2, 1, 3)
    qh, kh, vh = split(q), split(k), split(v)
    scores = jnp.einsum("bhqd,bhkd->bhqk", qh, kh) / math.sqrt(d)
    scores = scores + mask[:, :, None, :].astype(f32)      # [B,1,1,S]
    probs = jax.nn.softmax(scores, axis=-1)
    ctx = jnp.einsum("bhqk,bhkd->bhqd", probs, vh)
    ctx = ctx.transpose(0, 2, 1, 3).reshape(B, S, H)
    attn = ctx @ p["wo"] + p["bo"]
    h1 = _layer_norm(attn + x, p["g1"], p["b1"])
    inter = _gelu_erf(h1 @ p["wi"] + p["bi"])
    out = inter @ p["wd"] + p["bd"]
    return _layer_norm(out + h1, p["g2"], p["b2"])


if __name__ == "__main__":
    # Small shapes consistent with the module: batch=2, seq=8, hidden=32,
    # 4 heads (head_dim=8), intermediate=64, 2 layers.
    B, S, H, num_heads, I, L = 2, 8, 32, 4, 64, 2

    key = jax.random.PRNGKey(0)
    key, kx = jax.random.split(key)
    x = jax.random.normal(kx, (B, S, H), dtype=jnp.float32)

    # Additive attention mask: 0 for valid keys, -10000 for masked ones.
    mask = jnp.zeros((B, 1, S), jnp.float32)
    mask = mask.at[1, 0, S - 2:].set(-10000.0)

    def linear(k_, fan_in, fan_out):
        kw, kb = jax.random.split(k_)
        bound = 1.0 / math.sqrt(fan_in)
        w = jax.random.uniform(kw, (fan_in, fan_out), jnp.float32, -bound, bound)
        b = jax.random.uniform(kb, (1, fan_out), jnp.float32, -bound, bound)
        return w, b

    layer_params = []
    for _ in range(L):
        key, kq, kk, kv, ko, ki, kd = jax.random.split(key, 7)
        wq, bq = linear(kq, H, H)
        wk, bk = linear(kk, H, H)
        wv, bv = linear(kv, H, H)
        wo, bo = linear(ko, H, H)
        wi, bi = linear(ki, H, I)
        wd, bd = linear(kd, I, H)
        layer_params.append(dict(
            wq=wq, bq=bq, wk=wk, bk=bk, wv=wv, bv=bv,
            wo=wo, bo=bo,
            g1=jnp.ones((1, H), jnp.float32), b1=jnp.zeros((1, H), jnp.float32),
            wi=wi, bi=bi, wd=wd, bd=bd,
            g2=jnp.ones((1, H), jnp.float32), b2=jnp.zeros((1, H), jnp.float32)))

    out = bert_encoder(x, mask, layer_params, num_heads=num_heads)
    out = jax.block_until_ready(out)
    assert out.shape == (B, S, H)

    with jax.default_matmul_precision("highest"):
        ref = x
        for p in layer_params:
            ref = _reference_layer(ref, mask, p, num_heads)

    assert jnp.allclose(out, ref, atol=1e-3, rtol=1e-3), \
        float(jnp.max(jnp.abs(out - ref)))

    print("KERNEL_OK")
</pallas_src>

<mosaic_0001>
module attributes {stable_mosaic.version = 11 : i64} {
  func.func @_bert_layer_kernel(%arg0: i32, %arg1: memref<1x8x32xf32, #tpu.memory_space<vmem>>, %arg2: memref<1x1x8xf32, #tpu.memory_space<vmem>>, %arg3: memref<32x32xf32, #tpu.memory_space<vmem>>, %arg4: memref<1x32xf32, #tpu.memory_space<vmem>>, %arg5: memref<32x32xf32, #tpu.memory_space<vmem>>, %arg6: memref<1x32xf32, #tpu.memory_space<vmem>>, %arg7: memref<32x32xf32, #tpu.memory_space<vmem>>, %arg8: memref<1x32xf32, #tpu.memory_space<vmem>>, %arg9: memref<32x32xf32, #tpu.memory_space<vmem>>, %arg10: memref<1x32xf32, #tpu.memory_space<vmem>>, %arg11: memref<1x32xf32, #tpu.memory_space<vmem>>, %arg12: memref<1x32xf32, #tpu.memory_space<vmem>>, %arg13: memref<32x64xf32, #tpu.memory_space<vmem>>, %arg14: memref<1x64xf32, #tpu.memory_space<vmem>>, %arg15: memref<64x32xf32, #tpu.memory_space<vmem>>, %arg16: memref<1x32xf32, #tpu.memory_space<vmem>>, %arg17: memref<1x32xf32, #tpu.memory_space<vmem>>, %arg18: memref<1x32xf32, #tpu.memory_space<vmem>>, %arg19: memref<1x8x32xf32, #tpu.memory_space<vmem>>) attributes {dimension_semantics = [#tpu.dimension_semantics<parallel>], iteration_bounds = array<i64: 2>, scalar_prefetch = 0 : i64, scratch_operands = 0 : i64, tpu.core_type = #tpu.core_type<tc>, window_params = [{transform_indices = @transform_0, window_bounds = array<i64: 1, 8, 32>}, {transform_indices = @transform_1, window_bounds = array<i64: 1, 1, 8>}, {pipeline_mode = #tpu.pipeline_mode<synchronous>, transform_indices = @transform_2, window_bounds = array<i64: 32, 32>}, {pipeline_mode = #tpu.pipeline_mode<synchronous>, transform_indices = @transform_3, window_bounds = array<i64: 1, 32>}, {pipeline_mode = #tpu.pipeline_mode<synchronous>, transform_indices = @transform_4, window_bounds = array<i64: 32, 32>}, {pipeline_mode = #tpu.pipeline_mode<synchronous>, transform_indices = @transform_5, window_bounds = array<i64: 1, 32>}, {pipeline_mode = #tpu.pipeline_mode<synchronous>, transform_indices = @transform_6, window_bounds = array<i64: 32, 32>}, {pipeline_mode = #tpu.pipeline_mode<synchronous>, transform_indices = @transform_7, window_bounds = array<i64: 1, 32>}, {pipeline_mode = #tpu.pipeline_mode<synchronous>, transform_indices = @transform_8, window_bounds = array<i64: 32, 32>}, {pipeline_mode = #tpu.pipeline_mode<synchronous>, transform_indices = @transform_9, window_bounds = array<i64: 1, 32>}, {pipeline_mode = #tpu.pipeline_mode<synchronous>, transform_indices = @transform_10, window_bounds = array<i64: 1, 32>}, {pipeline_mode = #tpu.pipeline_mode<synchronous>, transform_indices = @transform_11, window_bounds = array<i64: 1, 32>}, {pipeline_mode = #tpu.pipeline_mode<synchronous>, transform_indices = @transform_12, window_bounds = array<i64: 32, 64>}, {pipeline_mode = #tpu.pipeline_mode<synchronous>, transform_indices = @transform_13, window_bounds = array<i64: 1, 64>}, {pipeline_mode = #tpu.pipeline_mode<synchronous>, transform_indices = @transform_14, window_bounds = array<i64: 64, 32>}, {pipeline_mode = #tpu.pipeline_mode<synchronous>, transform_indices = @transform_15, window_bounds = array<i64: 1, 32>}, {pipeline_mode = #tpu.pipeline_mode<synchronous>, transform_indices = @transform_16, window_bounds = array<i64: 1, 32>}, {pipeline_mode = #tpu.pipeline_mode<synchronous>, transform_indices = @transform_17, window_bounds = array<i64: 1, 32>}, {transform_indices = @transform_18, window_bounds = array<i64: 1, 8, 32>}]} {
    %c0 = arith.constant 0 : index
    %c0_0 = arith.constant 0 : index
    %c0_1 = arith.constant 0 : index
    %0 = vector.load %arg1[%c0, %c0_0, %c0_1] : memref<1x8x32xf32, #tpu.memory_space<vmem>>, vector<1x8x32xf32>
    %1 = vector.shape_cast %0 : vector<1x8x32xf32> to vector<8x32xf32>
    %c0_2 = arith.constant 0 : index
    %c0_3 = arith.constant 0 : index
    %c0_4 = arith.constant 0 : index
    %2 = vector.load %arg2[%c0_2, %c0_3, %c0_4] : memref<1x1x8xf32, #tpu.memory_space<vmem>>, vector<1x1x8xf32>
    %3 = vector.shape_cast %2 : vector<1x1x8xf32> to vector<1x8xf32>
    %c0_5 = arith.constant 0 : index
    %c0_6 = arith.constant 0 : index
    %4 = vector.load %arg3[%c0_5, %c0_6] : memref<32x32xf32, #tpu.memory_space<vmem>>, vector<32x32xf32>
    %cst = arith.constant dense<0.000000e+00> : vector<8x32xf32>
    %5 = tpu.matmul %1, %4, %cst {dimension_numbers = #tpu.dot_dimension_numbers<[1], [0], [0], [1], [0, 0, 1, 1], [], []>} : vector<8x32xf32>, vector<32x32xf32>, vector<8x32xf32> -> vector<8x32xf32>
    %c0_7 = arith.constant 0 : index
    %c0_8 = arith.constant 0 : index
    %6 = vector.load %arg4[%c0_7, %c0_8] : memref<1x32xf32, #tpu.memory_space<vmem>>, vector<1x32xf32>
    %7 = vector.broadcast %6 : vector<1x32xf32> to vector<8x32xf32>
    %8 = arith.addf %5, %7 : vector<8x32xf32>
    %c0_9 = arith.constant 0 : index
    %c0_10 = arith.constant 0 : index
    %9 = vector.load %arg5[%c0_9, %c0_10] : memref<32x32xf32, #tpu.memory_space<vmem>>, vector<32x32xf32>
    %cst_11 = arith.constant dense<0.000000e+00> : vector<8x32xf32>
    %10 = tpu.matmul %1, %9, %cst_11 {dimension_numbers = #tpu.dot_dimension_numbers<[1], [0], [0], [1], [0, 0, 1, 1], [], []>} : vector<8x32xf32>, vector<32x32xf32>, vector<8x32xf32> -> vector<8x32xf32>
    %c0_12 = arith.constant 0 : index
    %c0_13 = arith.constant 0 : index
    %11 = vector.load %arg6[%c0_12, %c0_13] : memref<1x32xf32, #tpu.memory_space<vmem>>, vector<1x32xf32>
    %12 = vector.broadcast %11 : vector<1x32xf32> to vector<8x32xf32>
    %13 = arith.addf %10, %12 : vector<8x32xf32>
    %c0_14 = arith.constant 0 : index
    %c0_15 = arith.constant 0 : index
    %14 = vector.load %arg7[%c0_14, %c0_15] : memref<32x32xf32, #tpu.memory_space<vmem>>, vector<32x32xf32>
    %cst_16 = arith.constant dense<0.000000e+00> : vector<8x32xf32>
    %15 = tpu.matmul %1, %14, %cst_16 {dimension_numbers = #tpu.dot_dimension_numbers<[1], [0], [0], [1], [0, 0, 1, 1], [], []>} : vector<8x32xf32>, vector<32x32xf32>, vector<8x32xf32> -> vector<8x32xf32>
    %c0_17 = arith.constant 0 : index
    %c0_18 = arith.constant 0 : index
    %16 = vector.load %arg8[%c0_17, %c0_18] : memref<1x32xf32, #tpu.memory_space<vmem>>, vector<1x32xf32>
    %17 = vector.broadcast %16 : vector<1x32xf32> to vector<8x32xf32>
    %18 = arith.addf %15, %17 : vector<8x32xf32>
    %19 = vector.extract_strided_slice %8 {offsets = [0, 0], sizes = [8, 8], strides = [1, 1]} : vector<8x32xf32> to vector<8x8xf32>
    %20 = vector.extract_strided_slice %13 {offsets = [0, 0], sizes = [8, 8], strides = [1, 1]} : vector<8x32xf32> to vector<8x8xf32>
    %21 = vector.extract_strided_slice %18 {offsets = [0, 0], sizes = [8, 8], strides = [1, 1]} : vector<8x32xf32> to vector<8x8xf32>
    %22 = tpu.transpose %20, [1, 0] : vector<8x8xf32> -> vector<8x8xf32>
    %cst_19 = arith.constant dense<0.000000e+00> : vector<8x8xf32>
    %23 = tpu.matmul %19, %22, %cst_19 {dimension_numbers = #tpu.dot_dimension_numbers<[1], [0], [0], [1], [0, 0, 1, 1], [], []>} : vector<8x8xf32>, vector<8x8xf32>, vector<8x8xf32> -> vector<8x8xf32>
    %cst_20 = arith.constant 0.353553385 : f32
    %24 = vector.broadcast %cst_20 : f32 to vector<8x8xf32>
    %25 = arith.mulf %23, %24 : vector<8x8xf32>
    %26 = vector.broadcast %3 : vector<1x8xf32> to vector<8x8xf32>
    %27 = arith.addf %25, %26 : vector<8x8xf32>
    %cst_21 = arith.constant dense<0xFF800000> : vector<8xf32>
    %28 = vector.multi_reduction <maximumf>, %27, %cst_21 [1] : vector<8x8xf32> to vector<8xf32>
    %29 = vector.shape_cast %28 : vector<8xf32> to vector<8x1xf32>
    %30 = vector.broadcast %29 : vector<8x1xf32> to vector<8x8xf32>
    %31 = arith.subf %27, %30 : vector<8x8xf32>
    %32 = math.exp %31 : vector<8x8xf32>
    %cst_22 = arith.constant dense<0.000000e+00> : vector<8xf32>
    %33 = vector.multi_reduction <add>, %32, %cst_22 [1] : vector<8x8xf32> to vector<8xf32>
    %34 = vector.shape_cast %33 : vector<8xf32> to vector<8x1xf32>
    %35 = vector.broadcast %34 : vector<8x1xf32> to vector<8x8xf32>
    %36 = arith.divf %32, %35 : vector<8x8xf32>
    %cst_23 = arith.constant dense<0.000000e+00> : vector<8x8xf32>
    %37 = tpu.matmul %36, %21, %cst_23 {dimension_numbers = #tpu.dot_dimension_numbers<[1], [0], [0], [1], [0, 0, 1, 1], [], []>} : vector<8x8xf32>, vector<8x8xf32>, vector<8x8xf32> -> vector<8x8xf32>
    %38 = vector.extract_strided_slice %8 {offsets = [0, 8], sizes = [8, 8], strides = [1, 1]} : vector<8x32xf32> to vector<8x8xf32>
    %39 = vector.extract_strided_slice %13 {offsets = [0, 8], sizes = [8, 8], strides = [1, 1]} : vector<8x32xf32> to vector<8x8xf32>
    %40 = vector.extract_strided_slice %18 {offsets = [0, 8], sizes = [8, 8], strides = [1, 1]} : vector<8x32xf32> to vector<8x8xf32>
    %41 = tpu.transpose %39, [1, 0] : vector<8x8xf32> -> vector<8x8xf32>
    %cst_24 = arith.constant dense<0.000000e+00> : vector<8x8xf32>
    %42 = tpu.matmul %38, %41, %cst_24 {dimension_numbers = #tpu.dot_dimension_numbers<[1], [0], [0], [1], [0, 0, 1, 1], [], []>} : vector<8x8xf32>, vector<8x8xf32>, vector<8x8xf32> -> vector<8x8xf32>
    %cst_25 = arith.constant 0.353553385 : f32
    %43 = vector.broadcast %cst_25 : f32 to vector<8x8xf32>
    %44 = arith.mulf %42, %43 : vector<8x8xf32>
    %45 = vector.broadcast %3 : vector<1x8xf32> to vector<8x8xf32>
    %46 = arith.addf %44, %45 : vector<8x8xf32>
    %cst_26 = arith.constant dense<0xFF800000> : vector<8xf32>
    %47 = vector.multi_reduction <maximumf>, %46, %cst_26 [1] : vector<8x8xf32> to vector<8xf32>
    %48 = vector.shape_cast %47 : vector<8xf32> to vector<8x1xf32>
    %49 = vector.broadcast %48 : vector<8x1xf32> to vector<8x8xf32>
    %50 = arith.subf %46, %49 : vector<8x8xf32>
    %51 = math.exp %50 : vector<8x8xf32>
    %cst_27 = arith.constant dense<0.000000e+00> : vector<8xf32>
    %52 = vector.multi_reduction <add>, %51, %cst_27 [1] : vector<8x8xf32> to vector<8xf32>
    %53 = vector.shape_cast %52 : vector<8xf32> to vector<8x1xf32>
    %54 = vector.broadcast %53 : vector<8x1xf32> to vector<8x8xf32>
    %55 = arith.divf %51, %54 : vector<8x8xf32>
    %cst_28 = arith.constant dense<0.000000e+00> : vector<8x8xf32>
    %56 = tpu.matmul %55, %40, %cst_28 {dimension_numbers = #tpu.dot_dimension_numbers<[1], [0], [0], [1], [0, 0, 1, 1], [], []>} : vector<8x8xf32>, vector<8x8xf32>, vector<8x8xf32> -> vector<8x8xf32>
    %57 = vector.extract_strided_slice %8 {offsets = [0, 16], sizes = [8, 8], strides = [1, 1]} : vector<8x32xf32> to vector<8x8xf32>
    %58 = vector.extract_strided_slice %13 {offsets = [0, 16], sizes = [8, 8], strides = [1, 1]} : vector<8x32xf32> to vector<8x8xf32>
    %59 = vector.extract_strided_slice %18 {offsets = [0, 16], sizes = [8, 8], strides = [1, 1]} : vector<8x32xf32> to vector<8x8xf32>
    %60 = tpu.transpose %58, [1, 0] : vector<8x8xf32> -> vector<8x8xf32>
    %cst_29 = arith.constant dense<0.000000e+00> : vector<8x8xf32>
    %61 = tpu.matmul %57, %60, %cst_29 {dimension_numbers = #tpu.dot_dimension_numbers<[1], [0], [0], [1], [0, 0, 1, 1], [], []>} : vector<8x8xf32>, vector<8x8xf32>, vector<8x8xf32> -> vector<8x8xf32>
    %cst_30 = arith.constant 0.353553385 : f32
    %62 = vector.broadcast %cst_30 : f32 to vector<8x8xf32>
    %63 = arith.mulf %61, %62 : vector<8x8xf32>
    %64 = vector.broadcast %3 : vector<1x8xf32> to vector<8x8xf32>
    %65 = arith.addf %63, %64 : vector<8x8xf32>
    %cst_31 = arith.constant dense<0xFF800000> : vector<8xf32>
    %66 = vector.multi_reduction <maximumf>, %65, %cst_31 [1] : vector<8x8xf32> to vector<8xf32>
    %67 = vector.shape_cast %66 : vector<8xf32> to vector<8x1xf32>
    %68 = vector.broadcast %67 : vector<8x1xf32> to vector<8x8xf32>
    %69 = arith.subf %65, %68 : vector<8x8xf32>
    %70 = math.exp %69 : vector<8x8xf32>
    %cst_32 = arith.constant dense<0.000000e+00> : vector<8xf32>
    %71 = vector.multi_reduction <add>, %70, %cst_32 [1] : vector<8x8xf32> to vector<8xf32>
    %72 = vector.shape_cast %71 : vector<8xf32> to vector<8x1xf32>
    %73 = vector.broadcast %72 : vector<8x1xf32> to vector<8x8xf32>
    %74 = arith.divf %70, %73 : vector<8x8xf32>
    %cst_33 = arith.constant dense<0.000000e+00> : vector<8x8xf32>
    %75 = tpu.matmul %74, %59, %cst_33 {dimension_numbers = #tpu.dot_dimension_numbers<[1], [0], [0], [1], [0, 0, 1, 1], [], []>} : vector<8x8xf32>, vector<8x8xf32>, vector<8x8xf32> -> vector<8x8xf32>
    %76 = vector.extract_strided_slice %8 {offsets = [0, 24], sizes = [8, 8], strides = [1, 1]} : vector<8x32xf32> to vector<8x8xf32>
    %77 = vector.extract_strided_slice %13 {offsets = [0, 24], sizes = [8, 8], strides = [1, 1]} : vector<8x32xf32> to vector<8x8xf32>
    %78 = vector.extract_strided_slice %18 {offsets = [0, 24], sizes = [8, 8], strides = [1, 1]} : vector<8x32xf32> to vector<8x8xf32>
    %79 = tpu.transpose %77, [1, 0] : vector<8x8xf32> -> vector<8x8xf32>
    %cst_34 = arith.constant dense<0.000000e+00> : vector<8x8xf32>
    %80 = tpu.matmul %76, %79, %cst_34 {dimension_numbers = #tpu.dot_dimension_numbers<[1], [0], [0], [1], [0, 0, 1, 1], [], []>} : vector<8x8xf32>, vector<8x8xf32>, vector<8x8xf32> -> vector<8x8xf32>
    %cst_35 = arith.constant 0.353553385 : f32
    %81 = vector.broadcast %cst_35 : f32 to vector<8x8xf32>
    %82 = arith.mulf %80, %81 : vector<8x8xf32>
    %83 = vector.broadcast %3 : vector<1x8xf32> to vector<8x8xf32>
    %84 = arith.addf %82, %83 : vector<8x8xf32>
    %cst_36 = arith.constant dense<0xFF800000> : vector<8xf32>
    %85 = vector.multi_reduction <maximumf>, %84, %cst_36 [1] : vector<8x8xf32> to vector<8xf32>
    %86 = vector.shape_cast %85 : vector<8xf32> to vector<8x1xf32>
    %87 = vector.broadcast %86 : vector<8x1xf32> to vector<8x8xf32>
    %88 = arith.subf %84, %87 : vector<8x8xf32>
    %89 = math.exp %88 : vector<8x8xf32>
    %cst_37 = arith.constant dense<0.000000e+00> : vector<8xf32>
    %90 = vector.multi_reduction <add>, %89, %cst_37 [1] : vector<8x8xf32> to vector<8xf32>
    %91 = vector.shape_cast %90 : vector<8xf32> to vector<8x1xf32>
    %92 = vector.broadcast %91 : vector<8x1xf32> to vector<8x8xf32>
    %93 = arith.divf %89, %92 : vector<8x8xf32>
    %cst_38 = arith.constant dense<0.000000e+00> : vector<8x8xf32>
    %94 = tpu.matmul %93, %78, %cst_38 {dimension_numbers = #tpu.dot_dimension_numbers<[1], [0], [0], [1], [0, 0, 1, 1], [], []>} : vector<8x8xf32>, vector<8x8xf32>, vector<8x8xf32> -> vector<8x8xf32>
    %95 = tpu.concatenate %37, %56, %75, %94 in 1 : vector<8x8xf32>, vector<8x8xf32>, vector<8x8xf32>, vector<8x8xf32> -> vector<8x32xf32>
    %c0_39 = arith.constant 0 : index
    %c0_40 = arith.constant 0 : index
    %96 = vector.load %arg9[%c0_39, %c0_40] : memref<32x32xf32, #tpu.memory_space<vmem>>, vector<32x32xf32>
    %cst_41 = arith.constant dense<0.000000e+00> : vector<8x32xf32>
    %97 = tpu.matmul %95, %96, %cst_41 {dimension_numbers = #tpu.dot_dimension_numbers<[1], [0], [0], [1], [0, 0, 1, 1], [], []>} : vector<8x32xf32>, vector<32x32xf32>, vector<8x32xf32> -> vector<8x32xf32>
    %c0_42 = arith.constant 0 : index
    %c0_43 = arith.constant 0 : index
    %98 = vector.load %arg10[%c0_42, %c0_43] : memref<1x32xf32, #tpu.memory_space<vmem>>, vector<1x32xf32>
    %99 = vector.broadcast %98 : vector<1x32xf32> to vector<8x32xf32>
    %100 = arith.addf %97, %99 : vector<8x32xf32>
    %101 = arith.addf %100, %1 : vector<8x32xf32>
    %c0_44 = arith.constant 0 : index
    %c0_45 = arith.constant 0 : index
    %102 = vector.load %arg11[%c0_44, %c0_45] : memref<1x32xf32, #tpu.memory_space<vmem>>, vector<1x32xf32>
    %c0_46 = arith.constant 0 : index
    %c0_47 = arith.constant 0 : index
    %103 = vector.load %arg12[%c0_46, %c0_47] : memref<1x32xf32, #tpu.memory_space<vmem>>, vector<1x32xf32>
    %cst_48 = arith.constant dense<0.000000e+00> : vector<8xf32>
    %104 = vector.multi_reduction <add>, %101, %cst_48 [1] : vector<8x32xf32> to vector<8xf32>
    %105 = vector.shape_cast %104 : vector<8xf32> to vector<8x1xf32>
    %cst_49 = arith.constant 3.200000e+01 : f32
    %106 = vector.broadcast %cst_49 : f32 to vector<8x1xf32>
    %107 = arith.divf %105, %106 : vector<8x1xf32>
    %108 = vector.broadcast %107 : vector<8x1xf32> to vector<8x32xf32>
    %109 = arith.subf %101, %108 : vector<8x32xf32>
    %110 = arith.mulf %109, %109 : vector<8x32xf32>
    %cst_50 = arith.constant dense<0.000000e+00> : vector<8xf32>
    %111 = vector.multi_reduction <add>, %110, %cst_50 [1] : vector<8x32xf32> to vector<8xf32>
    %112 = vector.shape_cast %111 : vector<8xf32> to vector<8x1xf32>
    %cst_51 = arith.constant 3.200000e+01 : f32
    %113 = vector.broadcast %cst_51 : f32 to vector<8x1xf32>
    %114 = arith.divf %112, %113 : vector<8x1xf32>
    %cst_52 = arith.constant 9.99999996E-13 : f32
    %115 = vector.broadcast %cst_52 : f32 to vector<8x1xf32>
    %116 = arith.addf %114, %115 : vector<8x1xf32>
    %117 = math.rsqrt %116 : vector<8x1xf32>
    %118 = vector.broadcast %117 : vector<8x1xf32> to vector<8x32xf32>
    %119 = arith.mulf %109, %118 : vector<8x32xf32>
    %120 = vector.broadcast %102 : vector<1x32xf32> to vector<8x32xf32>
    %121 = arith.mulf %119, %120 : vector<8x32xf32>
    %122 = vector.broadcast %103 : vector<1x32xf32> to vector<8x32xf32>
    %123 = arith.addf %121, %122 : vector<8x32xf32>
    %c0_53 = arith.constant 0 : index
    %c0_54 = arith.constant 0 : index
    %124 = vector.load %arg13[%c0_53, %c0_54] : memref<32x64xf32, #tpu.memory_space<vmem>>, vector<32x64xf32>
    %cst_55 = arith.constant dense<0.000000e+00> : vector<8x64xf32>
    %125 = tpu.matmul %123, %124, %cst_55 {dimension_numbers = #tpu.dot_dimension_numbers<[1], [0], [0], [1], [0, 0, 1, 1], [], []>} : vector<8x32xf32>, vector<32x64xf32>, vector<8x64xf32> -> vector<8x64xf32>
    %c0_56 = arith.constant 0 : index
    %c0_57 = arith.constant 0 : index
    %126 = vector.load %arg14[%c0_56, %c0_57] : memref<1x64xf32, #tpu.memory_space<vmem>>, vector<1x64xf32>
    %127 = vector.broadcast %126 : vector<1x64xf32> to vector<8x64xf32>
    %128 = arith.addf %125, %127 : vector<8x64xf32>
    %cst_58 = arith.constant 5.000000e-01 : f32
    %129 = vector.broadcast %cst_58 : f32 to vector<8x64xf32>
    %130 = arith.mulf %128, %129 : vector<8x64xf32>
    %cst_59 = arith.constant 0.707106769 : f32
    %131 = vector.broadcast %cst_59 : f32 to vector<8x64xf32>
    %132 = arith.mulf %128, %131 : vector<8x64xf32>
    %133 = math.erf %132 : vector<8x64xf32>
    %cst_60 = arith.constant 1.000000e+00 : f32
    %134 = vector.broadcast %cst_60 : f32 to vector<8x64xf32>
    %135 = arith.addf %134, %133 : vector<8x64xf32>
    %136 = arith.mulf %130, %135 : vector<8x64xf32>
    %c0_61 = arith.constant 0 : index
    %c0_62 = arith.constant 0 : index
    %137 = vector.load %arg15[%c0_61, %c0_62] : memref<64x32xf32, #tpu.memory_space<vmem>>, vector<64x32xf32>
    %cst_63 = arith.constant dense<0.000000e+00> : vector<8x32xf32>
    %138 = tpu.matmul %136, %137, %cst_63 {dimension_numbers = #tpu.dot_dimension_numbers<[1], [0], [0], [1], [0, 0, 1, 1], [], []>} : vector<8x64xf32>, vector<64x32xf32>, vector<8x32xf32> -> vector<8x32xf32>
    %c0_64 = arith.constant 0 : index
    %c0_65 = arith.constant 0 : index
    %139 = vector.load %arg16[%c0_64, %c0_65] : memref<1x32xf32, #tpu.memory_space<vmem>>, vector<1x32xf32>
    %140 = vector.broadcast %139 : vector<1x32xf32> to vector<8x32xf32>
    %141 = arith.addf %138, %140 : vector<8x32xf32>
    %142 = arith.addf %141, %123 : vector<8x32xf32>
    %c0_66 = arith.constant 0 : index
    %c0_67 = arith.constant 0 : index
    %143 = vector.load %arg17[%c0_66, %c0_67] : memref<1x32xf32, #tpu.memory_space<vmem>>, vector<1x32xf32>
    %c0_68 = arith.constant 0 : index
    %c0_69 = arith.constant 0 : index
    %144 = vector.load %arg18[%c0_68, %c0_69] : memref<1x32xf32, #tpu.memory_space<vmem>>, vector<1x32xf32>
    %cst_70 = arith.constant dense<0.000000e+00> : vector<8xf32>
    %145 = vector.multi_reduction <add>, %142, %cst_70 [1] : vector<8x32xf32> to vector<8xf32>
    %146 = vector.shape_cast %145 : vector<8xf32> to vector<8x1xf32>
    %cst_71 = arith.constant 3.200000e+01 : f32
    %147 = vector.broadcast %cst_71 : f32 to vector<8x1xf32>
    %148 = arith.divf %146, %147 : vector<8x1xf32>
    %149 = vector.broadcast %148 : vector<8x1xf32> to vector<8x32xf32>
    %150 = arith.subf %142, %149 : vector<8x32xf32>
    %151 = arith.mulf %150, %150 : vector<8x32xf32>
    %cst_72 = arith.constant dense<0.000000e+00> : vector<8xf32>
    %152 = vector.multi_reduction <add>, %151, %cst_72 [1] : vector<8x32xf32> to vector<8xf32>
    %153 = vector.shape_cast %152 : vector<8xf32> to vector<8x1xf32>
    %cst_73 = arith.constant 3.200000e+01 : f32
    %154 = vector.broadcast %cst_73 : f32 to vector<8x1xf32>
    %155 = arith.divf %153, %154 : vector<8x1xf32>
    %cst_74 = arith.constant 9.99999996E-13 : f32
    %156 = vector.broadcast %cst_74 : f32 to vector<8x1xf32>
    %157 = arith.addf %155, %156 : vector<8x1xf32>
    %158 = math.rsqrt %157 : vector<8x1xf32>
    %159 = vector.broadcast %158 : vector<8x1xf32> to vector<8x32xf32>
    %160 = arith.mulf %150, %159 : vector<8x32xf32>
    %161 = vector.broadcast %143 : vector<1x32xf32> to vector<8x32xf32>
    %162 = arith.mulf %160, %161 : vector<8x32xf32>
    %163 = vector.broadcast %144 : vector<1x32xf32> to vector<8x32xf32>
    %164 = arith.addf %162, %163 : vector<8x32xf32>
    %c0_75 = arith.constant 0 : index
    %c0_76 = arith.constant 0 : index
    %c0_77 = arith.constant 0 : index
    %165 = vector.load %arg19[%c0_75, %c0_76, %c0_77] : memref<1x8x32xf32, #tpu.memory_space<vmem>>, vector<1x8x32xf32>
    %166 = vector.shape_cast %165 : vector<1x8x32xf32> to vector<8x32xf32>
    %167 = vector.shape_cast %164 : vector<8x32xf32> to vector<1x8x32xf32>
    tpu.vector_store %arg19[%c0_75, %c0_76, %c0_77], %167 {strides = array<i32>} : memref<1x8x32xf32, #tpu.memory_space<vmem>>, vector<1x8x32xf32>,
    return
  }
  func.func @transform_0(%arg0: i32) -> (i32, i32, i32) {
    %c0_i32 = arith.constant 0 : i32
    %c0_i32_0 = arith.constant 0 : i32
    %c0_i32_1 = arith.constant 0 : i32
    return %arg0, %c0_i32, %c0_i32_0 : i32, i32, i32
  }
  func.func @transform_1(%arg0: i32) -> (i32, i32, i32) {
    %c0_i32 = arith.constant 0 : i32
    %c0_i32_0 = arith.constant 0 : i32
    %c0_i32_1 = arith.constant 0 : i32
    return %arg0, %c0_i32, %c0_i32_0 : i32, i32, i32
  }
  func.func @transform_2(%arg0: i32) -> (i32, i32) {
    %c0_i32 = arith.constant 0 : i32
    %c0_i32_0 = arith.constant 0 : i32
    %c0_i32_1 = arith.constant 0 : i32
    return %c0_i32, %c0_i32_0 : i32, i32
  }
  func.func @transform_3(%arg0: i32) -> (i32, i32) {
    %c0_i32 = arith.constant 0 : i32
    %c0_i32_0 = arith.constant 0 : i32
    %c0_i32_1 = arith.constant 0 : i32
    return %c0_i32, %c0_i32_0 : i32, i32
  }
  func.func @transform_4(%arg0: i32) -> (i32, i32) {
    %c0_i32 = arith.constant 0 : i32
    %c0_i32_0 = arith.constant 0 : i32
    %c0_i32_1 = arith.constant 0 : i32
    return %c0_i32, %c0_i32_0 : i32, i32
  }
  func.func @transform_5(%arg0: i32) -> (i32, i32) {
    %c0_i32 = arith.constant 0 : i32
    %c0_i32_0 = arith.constant 0 : i32
    %c0_i32_1 = arith.constant 0 : i32
    return %c0_i32, %c0_i32_0 : i32, i32
  }
  func.func @transform_6(%arg0: i32) -> (i32, i32) {
    %c0_i32 = arith.constant 0 : i32
    %c0_i32_0 = arith.constant 0 : i32
    %c0_i32_1 = arith.constant 0 : i32
    return %c0_i32, %c0_i32_0 : i32, i32
  }
  func.func @transform_7(%arg0: i32) -> (i32, i32) {
    %c0_i32 = arith.constant 0 : i32
    %c0_i32_0 = arith.constant 0 : i32
    %c0_i32_1 = arith.constant 0 : i32
    return %c0_i32, %c0_i32_0 : i32, i32
  }
  func.func @transform_8(%arg0: i32) -> (i32, i32) {
    %c0_i32 = arith.constant 0 : i32
    %c0_i32_0 = arith.constant 0 : i32
    %c0_i32_1 = arith.constant 0 : i32
    return %c0_i32, %c0_i32_0 : i32, i32
  }
  func.func @transform_9(%arg0: i32) -> (i32, i32) {
    %c0_i32 = arith.constant 0 : i32
    %c0_i32_0 = arith.constant 0 : i32
    %c0_i32_1 = arith.constant 0 : i32
    return %c0_i32, %c0_i32_0 : i32, i32
  }
  func.func @transform_10(%arg0: i32) -> (i32, i32) {
    %c0_i32 = arith.constant 0 : i32
    %c0_i32_0 = arith.constant 0 : i32
    %c0_i32_1 = arith.constant 0 : i32
    return %c0_i32, %c0_i32_0 : i32, i32
  }
  func.func @transform_11(%arg0: i32) -> (i32, i32) {
    %c0_i32 = arith.constant 0 : i32
    %c0_i32_0 = arith.constant 0 : i32
    %c0_i32_1 = arith.constant 0 : i32
    return %c0_i32, %c0_i32_0 : i32, i32
  }
  func.func @transform_12(%arg0: i32) -> (i32, i32) {
    %c0_i32 = arith.constant 0 : i32
    %c0_i32_0 = arith.constant 0 : i32
    %c0_i32_1 = arith.constant 0 : i32
    return %c0_i32, %c0_i32_0 : i32, i32
  }
  func.func @transform_13(%arg0: i32) -> (i32, i32) {
    %c0_i32 = arith.constant 0 : i32
    %c0_i32_0 = arith.constant 0 : i32
    %c0_i32_1 = arith.constant 0 : i32
    return %c0_i32, %c0_i32_0 : i32, i32
  }
  func.func @transform_14(%arg0: i32) -> (i32, i32) {
    %c0_i32 = arith.constant 0 : i32
    %c0_i32_0 = arith.constant 0 : i32
    %c0_i32_1 = arith.constant 0 : i32
    return %c0_i32, %c0_i32_0 : i32, i32
  }
  func.func @transform_15(%arg0: i32) -> (i32, i32) {
    %c0_i32 = arith.constant 0 : i32
    %c0_i32_0 = arith.constant 0 : i32
    %c0_i32_1 = arith.constant 0 : i32
    return %c0_i32, %c0_i32_0 : i32, i32
  }
  func.func @transform_16(%arg0: i32) -> (i32, i32) {
    %c0_i32 = arith.constant 0 : i32
    %c0_i32_0 = arith.constant 0 : i32
    %c0_i32_1 = arith.constant 0 : i32
    return %c0_i32, %c0_i32_0 : i32, i32
  }
  func.func @transform_17(%arg0: i32) -> (i32, i32) {
    %c0_i32 = arith.constant 0 : i32
    %c0_i32_0 = arith.constant 0 : i32
    %c0_i32_1 = arith.constant 0 : i32
    return %c0_i32, %c0_i32_0 : i32, i32
  }
  func.func @transform_18(%arg0: i32) -> (i32, i32, i32) {
    %c0_i32 = arith.constant 0 : i32
    %c0_i32_0 = arith.constant 0 : i32
    %c0_i32_1 = arith.constant 0 : i32
    return %arg0, %c0_i32, %c0_i32_0 : i32, i32, i32
  }
}

</mosaic_0001>

<llo_original>
// kernel: tpu_custom_call.1
$region0: #{tpu_custom_call.1}
  #allocation0 [shape = 'u32[]', space=smem, size = 0x4, offset = 0x4, fixed_abs, tag = 'smem constant byte address 0x4 - core index']
  #allocation1 [shape = 'u32[72,128]{1,0:T(1,128)}', space=vmem, size = 0x9000, scoped, tag = 'internal scratch']
  %s0 = inlined_call_operand.hbm [shape: f32[2,8,32], index: 0, kind: input, shape index: {}]
  %s1 = inlined_call_operand.hbm [shape: f32[2,1,8], index: 1, kind: input, shape index: {}]
  %s2 = inlined_call_operand.vmem [shape: f32[32,32], index: 2, kind: input, shape index: {}]
  %s3 = inlined_call_operand.vmem [shape: f32[1,32], index: 3, kind: input, shape index: {}]
  %s4 = inlined_call_operand.vmem [shape: f32[32,32], index: 4, kind: input, shape index: {}]
  %s5 = inlined_call_operand.vmem [shape: f32[1,32], index: 5, kind: input, shape index: {}]
  %s6 = inlined_call_operand.vmem [shape: f32[32,32], index: 6, kind: input, shape index: {}]
  %s7 = inlined_call_operand.vmem [shape: f32[1,32], index: 7, kind: input, shape index: {}]
  %s8 = inlined_call_operand.hbm [shape: f32[32,32], index: 8, kind: input, shape index: {}]
  %s9 = inlined_call_operand.vmem [shape: f32[1,32], index: 9, kind: input, shape index: {}]
  %s10 = inlined_call_operand.vmem [shape: f32[1,32], index: 10, kind: input, shape index: {}]
  %s11 = inlined_call_operand.vmem [shape: f32[1,32], index: 11, kind: input, shape index: {}]
  %s12 = inlined_call_operand.hbm [shape: f32[32,64], index: 12, kind: input, shape index: {}]
  %s13 = inlined_call_operand.vmem [shape: f32[1,64], index: 13, kind: input, shape index: {}]
  %s14 = inlined_call_operand.vmem [shape: f32[64,32], index: 14, kind: input, shape index: {}]
  %s15 = inlined_call_operand.vmem [shape: f32[1,32], index: 15, kind: input, shape index: {}]
  %s16 = inlined_call_operand.vmem [shape: f32[1,32], index: 16, kind: input, shape index: {}]
  %s17 = inlined_call_operand.vmem [shape: f32[1,32], index: 17, kind: input, shape index: {}]
  %s18 = inlined_call_operand.hbm [shape: f32[2,8,32], index: 18, kind: output, shape index: {}]
  %s19 = sld [smem:[#allocation0]]
  $region121: #{tpu_custom_call.1} parent=0
    _
  %s21 = ssub.s32 1, %s19
  %s22 = scalar_select 0, %s21, %s19
  $region1: #{tpu_custom_call.1} parent=0
    #allocation2 [shape = 'u8[8192]{0}', space=vmem, size = 0x2000, scoped, tag = 'input window, operand 0']
    #allocation3 [shape = 's32[2]{0}', space=sflag, size = 0x8, scoped, tag = 'scoped memory for tpu_custom_call.1']
    #allocation4 [shape = 's32[2]{0}', space=sflag, size = 0x8, scoped, tag = 'scoped memory for tpu_custom_call.1']
    #allocation5 [shape = 'u8[1024]{0}', space=vmem, size = 0x400, scoped, tag = 'input window, operand 1']
    #allocation6 [shape = 's32[2]{0}', space=sflag, size = 0x8, scoped, tag = 'scoped memory for tpu_custom_call.1']
    #allocation7 [shape = 'u8[16384]{0}', space=vmem, size = 0x4000, scoped, tag = 'input window, operand 8, single buffered']
    #allocation8 [shape = 'u8[16384]{0}', space=vmem, size = 0x4000, scoped, tag = 'input window, operand 12, single buffered']
    #allocation9 [shape = 's32[1]{0}', space=sflag, size = 0x4, scoped, tag = 'scoped memory for tpu_custom_call.1']
    #allocation10 [shape = 'u8[8192]{0}', space=vmem, size = 0x2000, scoped, tag = 'output window, operand 0']
    %23 = vsyncpa [#allocation3], 0
    %s24 = scalar_lea.sflag [#allocation3], 1
    %25 = vsyncpa %s24, 0
    %26 = vsyncpa [#allocation6], 0
    %s27 = scalar_lea.sflag [#allocation6], 1
    %28 = vsyncpa %s27, 0
    %29 = vsyncpa [#allocation9], 0
    %30 = vsyncpa [#allocation4], 0
    %s31 = scalar_lea.sflag [#allocation4], 1
    %32 = vsyncpa %s31, 0
    loop: start=0, step=1, limit=4
    $region2: #{tpu_custom_call.1} parent=1 // loop_pre_header
      _
    $region3: #{tpu_custom_call.1} parent=1 // loop_header
      %s34 = sphi 0, %s38
      %p35 = scmp.ge.s32.totalorder %s34, 4
      %s44 = sphi 0, %s46
      %s47 = sphi 0, %s44
      %s48 = sphi 0, %s47
      %s64 = sphi 0, %s48
      %s70 = sphi 0, %s72
      %s73 = sphi 0, %s70
      %s74 = sphi 0, %s73
      %s90 = sphi 0, %s74
      %s94 = sphi 0, %s94
      %s96 = sphi 0, %s94
      %s97 = sphi 0, %s96
      %s111 = sphi 0, %s97
      %s115 = sphi 0, %s115
      %s117 = sphi 0, %s115
      %s118 = sphi 0, %s117
      %s132 = sphi 0, %s118
      %s136 = sphi 0, %s136
      %s138 = sphi 0, %s136
      %s139 = sphi 0, %s138
      %s153 = sphi 0, %s139
      %s157 = sphi 0, %s157
      %s159 = sphi 0, %s157
      %s160 = sphi 0, %s159
      %s174 = sphi 0, %s160
      %s178 = sphi 0, %s178
      %s180 = sphi 0, %s178
      %s181 = sphi 0, %s180
      %s195 = sphi 0, %s181
      %s199 = sphi 0, %s199
      %s201 = sphi 0, %s199
      %s202 = sphi 0, %s201
      %s216 = sphi 0, %s202
      %s220 = sphi 0, %s220
      %s222 = sphi 0, %s220
      %s223 = sphi 0, %s222
      %s237 = sphi 0, %s223
      %s241 = sphi 0, %s241
      %s243 = sphi 0, %s241
      %s244 = sphi 0, %s243
      %s258 = sphi 0, %s244
      %s262 = sphi 0, %s262
      %s264 = sphi 0, %s262
      %s265 = sphi 0, %s264
      %s279 = sphi 0, %s265
      %s283 = sphi 0, %s283
      %s285 = sphi 0, %s283
      %s286 = sphi 0, %s285
      %s300 = sphi 0, %s286
      %s304 = sphi 0, %s304
      %s306 = sphi 0, %s304
      %s307 = sphi 0, %s306
      %s321 = sphi 0, %s307
      %s325 = sphi 0, %s325
      %s327 = sphi 0, %s325
      %s328 = sphi 0, %s327
      %s342 = sphi 0, %s328
      %s346 = sphi 0, %s346
      %s348 = sphi 0, %s346
      %s349 = sphi 0, %s348
      %s363 = sphi 0, %s349
      %s367 = sphi 0, %s367
      %s369 = sphi 0, %s367
      %s370 = sphi 0, %s369
      %s384 = sphi 0, %s370
      %s388 = sphi 0, %s388
      %s390 = sphi 0, %s388
      %s391 = sphi 0, %s390
      %s405 = sphi 0, %s391
      %s409 = sphi 0, %s409
      %s411 = sphi 0, %s409
      %s412 = sphi 0, %s411
      %s426 = sphi 0, %s412
      %s432 = sphi 0, %s434
      %s435 = sphi 0, %s432
      %s436 = sphi 0, %s435
      %s452 = sphi 0, %s436
    $region4: #{tpu_custom_call.1} parent=1 // loop_header_branch
      %37 = sbr.rel (%p35) target = $region8
    $region5: #{tpu_custom_call.1} parent=1 // loop_body
      %s39 = ssub.s32 %s34, 1
      %s40 = ssub.s32 %s34, 2
      %s41 = sadd.s32 %s34, 1
      %s42 = ssub.s32 %s34, %s41
      %p43 = scmp.eq.s32.totalorder %s42, 0
      %s45 = sadd.s32 %s44, 1
      %s46 = scalar_select %p43, %s44, %s45
      %p49 = pneg %p43
      %p50 = scmp.eq.s32.totalorder %s34, 1
      %p51 = por %p49, %p50
      %p52 = scmp.ne.s32.totalorder %s44, %s47
      %p53 = scmp.eq.s32.totalorder %s34, 0
      %p54 = por %p52, %p53
      %p55 = scmp.ne.s32.totalorder %s44, %s47
      %p56 = scmp.eq.s32.totalorder %s39, 1
      %p57 = por %p55, %p56
      %p58 = scmp.ne.s32.totalorder %s47, %s48
      %p59 = scmp.eq.s32.totalorder %s39, 0
      %p60 = por %p58, %p59
      %p61 = scmp.ne.s32.totalorder %s47, %s48
      %p62 = scmp.eq.s32.totalorder %s40, 1
      %p63 = por %p61, %p62
      %p65 = scmp.ne.s32.totalorder %s48, %s64
      %p66 = scmp.eq.s32.totalorder %s40, 0
      %p67 = por %p65, %p66
      %s68 = ssub.s32 %s34, %s41
      %p69 = scmp.eq.s32.totalorder %s68, 0
      %s71 = sadd.s32 %s70, 1
      %s72 = scalar_select %p69, %s70, %s71
      %p75 = pneg %p69
      %p76 = scmp.eq.s32.totalorder %s34, 1
      %p77 = por %p75, %p76
      %p78 = scmp.ne.s32.totalorder %s70, %s73
      %p79 = scmp.eq.s32.totalorder %s34, 0
      %p80 = por %p78, %p79
      %p81 = scmp.ne.s32.totalorder %s70, %s73
      %p82 = scmp.eq.s32.totalorder %s39, 1
      %p83 = por %p81, %p82
      %p84 = scmp.ne.s32.totalorder %s73, %s74
      %p85 = scmp.eq.s32.totalorder %s39, 0
      %p86 = por %p84, %p85
      %p87 = scmp.ne.s32.totalorder %s73, %s74
      %p88 = scmp.eq.s32.totalorder %s40, 1
      %p89 = por %p87, %p88
      %p91 = scmp.ne.s32.totalorder %s74, %s90
      %p92 = scmp.eq.s32.totalorder %s40, 0
      %p93 = por %p91, %p92
      %s95 = sadd.s32 %s94, 1
      %p98 = scmp.eq.s32.totalorder %s34, 1
      %p99 = scmp.ne.s32.totalorder %s94, %s96
      %p100 = scmp.eq.s32.totalorder %s34, 0
      %p101 = por %p99, %p100
      %p102 = scmp.ne.s32.totalorder %s94, %s96
      %p103 = scmp.eq.s32.totalorder %s39, 1
      %p104 = por %p102, %p103
      %p105 = scmp.ne.s32.totalorder %s96, %s97
      %p106 = scmp.eq.s32.totalorder %s39, 0
      %p107 = por %p105, %p106
      %p108 = scmp.ne.s32.totalorder %s96, %s97
      %p109 = scmp.eq.s32.totalorder %s40, 1
      %p110 = por %p108, %p109
      %p112 = scmp.ne.s32.totalorder %s97, %s111
      %p113 = scmp.eq.s32.totalorder %s40, 0
      %p114 = por %p112, %p113
      %s116 = sadd.s32 %s115, 1
      %p119 = scmp.eq.s32.totalorder %s34, 1
      %p120 = scmp.ne.s32.totalorder %s115, %s117
      %p121 = scmp.eq.s32.totalorder %s34, 0
      %p122 = por %p120, %p121
      %p123 = scmp.ne.s32.totalorder %s115, %s117
      %p124 = scmp.eq.s32.totalorder %s39, 1
      %p125 = por %p123, %p124
      %p126 = scmp.ne.s32.totalorder %s117, %s118
      %p127 = scmp.eq.s32.totalorder %s39, 0
      %p128 = por %p126, %p127
      %p129 = scmp.ne.s32.totalorder %s117, %s118
      %p130 = scmp.eq.s32.totalorder %s40, 1
      %p131 = por %p129, %p130
      %p133 = scmp.ne.s32.totalorder %s118, %s132
      %p134 = scmp.eq.s32.totalorder %s40, 0
      %p135 = por %p133, %p134
      %s137 = sadd.s32 %s136, 1
      %p140 = scmp.eq.s32.totalorder %s34, 1
      %p141 = scmp.ne.s32.totalorder %s136, %s138
      %p142 = scmp.eq.s32.totalorder %s34, 0
      %p143 = por %p141, %p142
      %p144 = scmp.ne.s32.totalorder %s136, %s138
      %p145 = scmp.eq.s32.totalorder %s39, 1
      %p146 = por %p144, %p145
      %p147 = scmp.ne.s32.totalorder %s138, %s139
      %p148 = scmp.eq.s32.totalorder %s39, 0
      %p149 = por %p147, %p148
      %p150 = scmp.ne.s32.totalorder %s138, %s139
      %p151 = scmp.eq.s32.totalorder %s40, 1
      %p152 = por %p150, %p151
      %p154 = scmp.ne.s32.totalorder %s139, %s153
      %p155 = scmp.eq.s32.totalorder %s40, 0
      %p156 = por %p154, %p155
      %s158 = sadd.s32 %s157, 1
      %p161 = scmp.eq.s32.totalorder %s34, 1
      %p162 = scmp.ne.s32.totalorder %s157, %s159
      %p163 = scmp.eq.s32.totalorder %s34, 0
      %p164 = por %p162, %p163
      %p165 = scmp.ne.s32.totalorder %s157, %s159
      %p166 = scmp.eq.s32.totalorder %s39, 1
      %p167 = por %p165, %p166
      %p168 = scmp.ne.s32.totalorder %s159, %s160
      %p169 = scmp.eq.s32.totalorder %s39, 0
      %p170 = por %p168, %p169
      %p171 = scmp.ne.s32.totalorder %s159, %s160
      %p172 = scmp.eq.s32.totalorder %s40, 1
      %p173 = por %p171, %p172
      %p175 = scmp.ne.s32.totalorder %s160, %s174
      %p176 = scmp.eq.s32.totalorder %s40, 0
      %p177 = por %p175, %p176
      %s179 = sadd.s32 %s178, 1
      %p182 = scmp.eq.s32.totalorder %s34, 1
      %p183 = scmp.ne.s32.totalorder %s178, %s180
      %p184 = scmp.eq.s32.totalorder %s34, 0
      %p185 = por %p183, %p184
      %p186 = scmp.ne.s32.totalorder %s178, %s180
      %p187 = scmp.eq.s32.totalorder %s39, 1
      %p188 = por %p186, %p187
      %p189 = scmp.ne.s32.totalorder %s180, %s181
      %p190 = scmp.eq.s32.totalorder %s39, 0
      %p191 = por %p189, %p190
      %p192 = scmp.ne.s32.totalorder %s180, %s181
      %p193 = scmp.eq.s32.totalorder %s40, 1
      %p194 = por %p192, %p193
      %p196 = scmp.ne.s32.totalorder %s181, %s195
      %p197 = scmp.eq.s32.totalorder %s40, 0
      %p198 = por %p196, %p197
      %s200 = sadd.s32 %s199, 1
      %p203 = scmp.eq.s32.totalorder %s34, 1
      %p204 = scmp.ne.s32.totalorder %s199, %s201
      %p205 = scmp.eq.s32.totalorder %s34, 0
      %p206 = por %p204, %p205
      %p207 = scmp.ne.s32.totalorder %s199, %s201
      %p208 = scmp.eq.s32.totalorder %s39, 1
      %p209 = por %p207, %p208
      %p210 = scmp.ne.s32.totalorder %s201, %s202
      %p211 = scmp.eq.s32.totalorder %s39, 0
      %p212 = por %p210, %p211
      %p213 = scmp.ne.s32.totalorder %s201, %s202
      %p214 = scmp.eq.s32.totalorder %s40, 1
      %p215 = por %p213, %p214
      %p217 = scmp.ne.s32.totalorder %s202, %s216
      %p218 = scmp.eq.s32.totalorder %s40, 0
      %p219 = por %p217, %p218
      %s221 = sadd.s32 %s220, 1
      %p224 = scmp.eq.s32.totalorder %s34, 1
      %p225 = scmp.ne.s32.totalorder %s220, %s222
      %p226 = scmp.eq.s32.totalorder %s34, 0
      %p227 = por %p225, %p226
      %p228 = scmp.ne.s32.totalorder %s220, %s222
      %p229 = scmp.eq.s32.totalorder %s39, 1
      %p230 = por %p228, %p229
      %p231 = scmp.ne.s32.totalorder %s222, %s223
      %p232 = scmp.eq.s32.totalorder %s39, 0
      %p233 = por %p231, %p232
      %p234 = scmp.ne.s32.totalorder %s222, %s223
      %p235 = scmp.eq.s32.totalorder %s40, 1
      %p236 = por %p234, %p235
      %p238 = scmp.ne.s32.totalorder %s223, %s237
      %p239 = scmp.eq.s32.totalorder %s40, 0
      %p240 = por %p238, %p239
      %s242 = sadd.s32 %s241, 1
      %p245 = scmp.eq.s32.totalorder %s34, 1
      %p246 = scmp.ne.s32.totalorder %s241, %s243
      %p247 = scmp.eq.s32.totalorder %s34, 0
      %p248 = por %p246, %p247
      %p249 = scmp.ne.s32.totalorder %s241, %s243
      %p250 = scmp.eq.s32.totalorder %s39, 1
      %p251 = por %p249, %p250
      %p252 = scmp.ne.s32.totalorder %s243, %s244
      %p253 = scmp.eq.s32.totalorder %s39, 0
      %p254 = por %p252, %p253
      %p255 = scmp.ne.s32.totalorder %s243, %s244
      %p256 = scmp.eq.s32.totalorder %s40, 1
      %p257 = por %p255, %p256
      %p259 = scmp.ne.s32.totalorder %s244, %s258
      %p260 = scmp.eq.s32.totalorder %s40, 0
      %p261 = por %p259, %p260
      %s263 = sadd.s32 %s262, 1
      %p266 = scmp.eq.s32.totalorder %s34, 1
      %p267 = scmp.ne.s32.totalorder %s262, %s264
      %p268 = scmp.eq.s32.totalorder %s34, 0
      %p269 = por %p267, %p268
      %p270 = scmp.ne.s32.totalorder %s262, %s264
      %p271 = scmp.eq.s32.totalorder %s39, 1
      %p272 = por %p270, %p271
      %p273 = scmp.ne.s32.totalorder %s264, %s265
      %p274 = scmp.eq.s32.totalorder %s39, 0
      %p275 = por %p273, %p274
      %p276 = scmp.ne.s32.totalorder %s264, %s265
      %p277 = scmp.eq.s32.totalorder %s40, 1
      %p278 = por %p276, %p277
      %p280 = scmp.ne.s32.totalorder %s265, %s279
      %p281 = scmp.eq.s32.totalorder %s40, 0
      %p282 = por %p280, %p281
      %s284 = sadd.s32 %s283, 1
      %p287 = scmp.eq.s32.totalorder %s34, 1
      %p288 = scmp.ne.s32.totalorder %s283, %s285
      %p289 = scmp.eq.s32.totalorder %s34, 0
      %p290 = por %p288, %p289
      %p291 = scmp.ne.s32.totalorder %s283, %s285
      %p292 = scmp.eq.s32.totalorder %s39, 1
      %p293 = por %p291, %p292
      %p294 = scmp.ne.s32.totalorder %s285, %s286
      %p295 = scmp.eq.s32.totalorder %s39, 0
      %p296 = por %p294, %p295
      %p297 = scmp.ne.s32.totalorder %s285, %s286
      %p298 = scmp.eq.s32.totalorder %s40, 1
      %p299 = por %p297, %p298
      %p301 = scmp.ne.s32.totalorder %s286, %s300
      %p302 = scmp.eq.s32.totalorder %s40, 0
      %p303 = por %p301, %p302
      %s305 = sadd.s32 %s304, 1
      %p308 = scmp.eq.s32.totalorder %s34, 1
      %p309 = scmp.ne.s32.totalorder %s304, %s306
      %p310 = scmp.eq.s32.totalorder %s34, 0
      %p311 = por %p309, %p310
      %p312 = scmp.ne.s32.totalorder %s304, %s306
      %p313 = scmp.eq.s32.totalorder %s39, 1
      %p314 = por %p312, %p313
      %p315 = scmp.ne.s32.totalorder %s306, %s307
      %p316 = scmp.eq.s32.totalorder %s39, 0
      %p317 = por %p315, %p316
      %p318 = scmp.ne.s32.totalorder %s306, %s307
      %p319 = scmp.eq.s32.totalorder %s40, 1
      %p320 = por %p318, %p319
      %p322 = scmp.ne.s32.totalorder %s307, %s321
      %p323 = scmp.eq.s32.totalorder %s40, 0
      %p324 = por %p322, %p323
      %s326 = sadd.s32 %s325, 1
      %p329 = scmp.eq.s32.totalorder %s34, 1
      %p330 = scmp.ne.s32.totalorder %s325, %s327
      %p331 = scmp.eq.s32.totalorder %s34, 0
      %p332 = por %p330, %p331
      %p333 = scmp.ne.s32.totalorder %s325, %s327
      %p334 = scmp.eq.s32.totalorder %s39, 1
      %p335 = por %p333, %p334
      %p336 = scmp.ne.s32.totalorder %s327, %s328
      %p337 = scmp.eq.s32.totalorder %s39, 0
      %p338 = por %p336, %p337
      %p339 = scmp.ne.s32.totalorder %s327, %s328
      %p340 = scmp.eq.s32.totalorder %s40, 1
      %p341 = por %p339, %p340
      %p343 = scmp.ne.s32.totalorder %s328, %s342
      %p344 = scmp.eq.s32.totalorder %s40, 0
      %p345 = por %p343, %p344
      %s347 = sadd.s32 %s346, 1
      %p350 = scmp.eq.s32.totalorder %s34, 1
      %p351 = scmp.ne.s32.totalorder %s346, %s348
      %p352 = scmp.eq.s32.totalorder %s34, 0
      %p353 = por %p351, %p352
      %p354 = scmp.ne.s32.totalorder %s346, %s348
      %p355 = scmp.eq.s32.totalorder %s39, 1
      %p356 = por %p354, %p355
      %p357 = scmp.ne.s32.totalorder %s348, %s349
      %p358 = scmp.eq.s32.totalorder %s39, 0
      %p359 = por %p357, %p358
      %p360 = scmp.ne.s32.totalorder %s348, %s349
      %p361 = scmp.eq.s32.totalorder %s40, 1
      %p362 = por %p360, %p361
      %p364 = scmp.ne.s32.totalorder %s349, %s363
      %p365 = scmp.eq.s32.totalorder %s40, 0
      %p366 = por %p364, %p365
      %s368 = sadd.s32 %s367, 1
      %p371 = scmp.eq.s32.totalorder %s34, 1
      %p372 = scmp.ne.s32.totalorder %s367, %s369
      %p373 = scmp.eq.s32.totalorder %s34, 0
      %p374 = por %p372, %p373
      %p375 = scmp.ne.s32.totalorder %s367, %s369
      %p376 = scmp.eq.s32.totalorder %s39, 1
      %p377 = por %p375, %p376
      %p378 = scmp.ne.s32.totalorder %s369, %s370
      %p379 = scmp.eq.s32.totalorder %s39, 0
      %p380 = por %p378, %p379
      %p381 = scmp.ne.s32.totalorder %s369, %s370
      %p382 = scmp.eq.s32.totalorder %s40, 1
      %p383 = por %p381, %p382
      %p385 = scmp.ne.s32.totalorder %s370, %s384
      %p386 = scmp.eq.s32.totalorder %s40, 0
      %p387 = por %p385, %p386
      %s389 = sadd.s32 %s388, 1
      %p392 = scmp.eq.s32.totalorder %s34, 1
      %p393 = scmp.ne.s32.totalorder %s388, %s390
      %p394 = scmp.eq.s32.totalorder %s34, 0
      %p395 = por %p393, %p394
      %p396 = scmp.ne.s32.totalorder %s388, %s390
      %p397 = scmp.eq.s32.totalorder %s39, 1
      %p398 = por %p396, %p397
      %p399 = scmp.ne.s32.totalorder %s390, %s391
      %p400 = scmp.eq.s32.totalorder %s39, 0
      %p401 = por %p399, %p400
      %p402 = scmp.ne.s32.totalorder %s390, %s391
      %p403 = scmp.eq.s32.totalorder %s40, 1
      %p404 = por %p402, %p403
      %p406 = scmp.ne.s32.totalorder %s391, %s405
      %p407 = scmp.eq.s32.totalorder %s40, 0
      %p408 = por %p406, %p407
      %s410 = sadd.s32 %s409, 1
      %p413 = scmp.eq.s32.totalorder %s34, 1
      %p414 = scmp.ne.s32.totalorder %s409, %s411
      %p415 = scmp.eq.s32.totalorder %s34, 0
      %p416 = por %p414, %p415
      %p417 = scmp.ne.s32.totalorder %s409, %s411
      %p418 = scmp.eq.s32.totalorder %s39, 1
      %p419 = por %p417, %p418
      %p420 = scmp.ne.s32.totalorder %s411, %s412
      %p421 = scmp.eq.s32.totalorder %s39, 0
      %p422 = por %p420, %p421
      %p423 = scmp.ne.s32.totalorder %s411, %s412
      %p424 = scmp.eq.s32.totalorder %s40, 1
      %p425 = por %p423, %p424
      %p427 = scmp.ne.s32.totalorder %s412, %s426
      %p428 = scmp.eq.s32.totalorder %s40, 0
      %p429 = por %p427, %p428
      %s430 = ssub.s32 %s34, %s41
      %p431 = scmp.eq.s32.totalorder %s430, 0
      %s433 = sadd.s32 %s432, 1
      %s434 = scalar_select %p431, %s432, %s433
      %p437 = pneg %p431
      %p438 = scmp.eq.s32.totalorder %s34, 1
      %p439 = por %p437, %p438
      %p440 = scmp.ne.s32.totalorder %s432, %s435
      %p441 = scmp.eq.s32.totalorder %s34, 0
      %p442 = por %p440, %p441
      %p443 = scmp.ne.s32.totalorder %s432, %s435
      %p444 = scmp.eq.s32.totalorder %s39, 1
      %p445 = por %p443, %p444
      %p446 = scmp.ne.s32.totalorder %s435, %s436
      %p447 = scmp.eq.s32.totalorder %s39, 0
      %p448 = por %p446, %p447
      %p449 = scmp.ne.s32.totalorder %s435, %s436
      %p450 = scmp.eq.s32.totalorder %s40, 1
      %p451 = por %p449, %p450
      %p453 = scmp.ne.s32.totalorder %s436, %s452
      %p454 = scmp.eq.s32.totalorder %s40, 0
      %p455 = por %p453, %p454
      %p456 = scmp.le.s32.totalorder 1, %s34
      %p457 = scmp.lt.s32.totalorder %s34, 3
      %p458 = pnand %p456, %p457
      %p459 = pneg %p458
      // Predicated region
      $region9: #{tpu_custom_call.1} parent=5 // pred_check
        _
      $region10: #{tpu_custom_call.1} parent=5 // pred_check_branch
        %461 = sbr.rel (%p458) target = $region12
      $region11: #{tpu_custom_call.1} parent=5 // pred_region
        %s462 = ssub.s32 %s34, 1
        // Predicated region
        $region13: #{tpu_custom_call.1} parent=11 // pred_check
          %p463 = pneg %p107
        $region14: #{tpu_custom_call.1} parent=11 // pred_check_branch
          %465 = sbr.rel (%p463) target = $region16
        $region15: #{tpu_custom_call.1} parent=11 // pred_region
          _
        $region16: #{tpu_custom_call.1} parent=11 // pred_fallthru
          _
        // Predicated region
        $region17: #{tpu_custom_call.1} parent=11 // pred_check
          %p466 = pneg %p128
        $region18: #{tpu_custom_call.1} parent=11 // pred_check_branch
          %468 = sbr.rel (%p466) target = $region20
        $region19: #{tpu_custom_call.1} parent=11 // pred_region
          _
        $region20: #{tpu_custom_call.1} parent=11 // pred_fallthru
          _
        // Predicated region
        $region21: #{tpu_custom_call.1} parent=11 // pred_check
          %p469 = pneg %p149
        $region22: #{tpu_custom_call.1} parent=11 // pred_check_branch
          %471 = sbr.rel (%p469) target = $region24
        $region23: #{tpu_custom_call.1} parent=11 // pred_region
          _
        $region24: #{tpu_custom_call.1} parent=11 // pred_fallthru
          _
        // Predicated region
        $region25: #{tpu_custom_call.1} parent=11 // pred_check
          %p472 = pneg %p170
        $region26: #{tpu_custom_call.1} parent=11 // pred_check_branch
          %474 = sbr.rel (%p472) target = $region28
        $region27: #{tpu_custom_call.1} parent=11 // pred_region
          _
        $region28: #{tpu_custom_call.1} parent=11 // pred_fallthru
          _
        // Predicated region
        $region29: #{tpu_custom_call.1} parent=11 // pred_check
          %p475 = pneg %p191
        $region30: #{tpu_custom_call.1} parent=11 // pred_check_branch
          %477 = sbr.rel (%p475) target = $region32
        $region31: #{tpu_custom_call.1} parent=11 // pred_region
          _
        $region32: #{tpu_custom_call.1} parent=11 // pred_fallthru
          _
        // Predicated region
        $region33: #{tpu_custom_call.1} parent=11 // pred_check
          %p478 = pneg %p212
        $region34: #{tpu_custom_call.1} parent=11 // pred_check_branch
          %480 = sbr.rel (%p478) target = $region36
        $region35: #{tpu_custom_call.1} parent=11 // pred_region
          _
        $region36: #{tpu_custom_call.1} parent=11 // pred_fallthru
          _
        // Predicated region
        $region37: #{tpu_custom_call.1} parent=11 // pred_check
          %p481 = pneg %p233
        $region38: #{tpu_custom_call.1} parent=11 // pred_check_branch
          %483 = sbr.rel (%p481) target = $region40
        $region39: #{tpu_custom_call.1} parent=11 // pred_region
          %485 = vsyncadd [#allocation6], 0
          %s486 = sshll.u32 %s8, 4
          %s487 = int_to_ptr.hbm [resolvable:$true] %s486
          %s488 = sshll.u32 [#allocation7], 4
          %s489 = int_to_ptr.vmem [resolvable:$true] %s488
          %494 = dma.hbm_to_vmem [thread:$0]  %s487, 512, %s489, [#allocation6], 128, 128, 8
        $region40: #{tpu_custom_call.1} parent=11 // pred_fallthru
          _
        // Predicated region
        $region41: #{tpu_custom_call.1} parent=11 // pred_check
          %p495 = pneg %p254
        $region42: #{tpu_custom_call.1} parent=11 // pred_check_branch
          %497 = sbr.rel (%p495) target = $region44
        $region43: #{tpu_custom_call.1} parent=11 // pred_region
          _
        $region44: #{tpu_custom_call.1} parent=11 // pred_fallthru
          _
        // Predicated region
        $region45: #{tpu_custom_call.1} parent=11 // pred_check
          %p498 = pneg %p275
        $region46: #{tpu_custom_call.1} parent=11 // pred_check_branch
          %500 = sbr.rel (%p498) target = $region48
        $region47: #{tpu_custom_call.1} parent=11 // pred_region
          _
        $region48: #{tpu_custom_call.1} parent=11 // pred_fallthru
          _
        // Predicated region
        $region49: #{tpu_custom_call.1} parent=11 // pred_check
          %p501 = pneg %p296
        $region50: #{tpu_custom_call.1} parent=11 // pred_check_branch
          %503 = sbr.rel (%p501) target = $region52
        $region51: #{tpu_custom_call.1} parent=11 // pred_region
          _
        $region52: #{tpu_custom_call.1} parent=11 // pred_fallthru
          _
        // Predicated region
        $region53: #{tpu_custom_call.1} parent=11 // pred_check
          %p504 = pneg %p317
        $region54: #{tpu_custom_call.1} parent=11 // pred_check_branch
          %506 = sbr.rel (%p504) target = $region56
        $region55: #{tpu_custom_call.1} parent=11 // pred_region
          %508 = vsyncadd [#allocation9], 0
          %s509 = sshll.u32 %s12, 4
          %s510 = int_to_ptr.hbm [resolvable:$true] %s509
          %s511 = sshll.u32 [#allocation8], 4
          %s512 = int_to_ptr.vmem [resolvable:$true] %s511
          %517 = dma.hbm_to_vmem [thread:$0]  %s510, 512, %s512, [#allocation9], 128, 128, 8
        $region56: #{tpu_custom_call.1} parent=11 // pred_fallthru
          _
        // Predicated region
        $region57: #{tpu_custom_call.1} parent=11 // pred_check
          %p518 = pneg %p338
        $region58: #{tpu_custom_call.1} parent=11 // pred_check_branch
          %520 = sbr.rel (%p518) target = $region60
        $region59: #{tpu_custom_call.1} parent=11 // pred_region
          _
        $region60: #{tpu_custom_call.1} parent=11 // pred_fallthru
          _
        // Predicated region
        $region61: #{tpu_custom_call.1} parent=11 // pred_check
          %p521 = pneg %p359
        $region62: #{tpu_custom_call.1} parent=11 // pred_check_branch
          %523 = sbr.rel (%p521) target = $region64
        $region63: #{tpu_custom_call.1} parent=11 // pred_region
          _
        $region64: #{tpu_custom_call.1} parent=11 // pred_fallthru
          _
        // Predicated region
        $region65: #{tpu_custom_call.1} parent=11 // pred_check
          %p524 = pneg %p380
        $region66: #{tpu_custom_call.1} parent=11 // pred_check_branch
          %526 = sbr.rel (%p524) target = $region68
        $region67: #{tpu_custom_call.1} parent=11 // pred_region
          _
        $region68: #{tpu_custom_call.1} parent=11 // pred_fallthru
          _
        // Predicated region
        $region69: #{tpu_custom_call.1} parent=11 // pred_check
          %p527 = pneg %p401
        $region70: #{tpu_custom_call.1} parent=11 // pred_check_branch
          %529 = sbr.rel (%p527) target = $region72
        $region71: #{tpu_custom_call.1} parent=11 // pred_region
          _
        $region72: #{tpu_custom_call.1} parent=11 // pred_fallthru
          _
        // Predicated region
        $region73: #{tpu_custom_call.1} parent=11 // pred_check
          %p530 = pneg %p422
        $region74: #{tpu_custom_call.1} parent=11 // pred_check_branch
          %532 = sbr.rel (%p530) target = $region76
        $region75: #{tpu_custom_call.1} parent=11 // pred_region
          _
        $region76: #{tpu_custom_call.1} parent=11 // pred_fallthru
          _
      $region12: #{tpu_custom_call.1} parent=5 // pred_fallthru
        _
      %p533 = scmp.lt.s32.totalorder %s34, 2
      // Predicated region
      $region77: #{tpu_custom_call.1} parent=5 // pred_check
        %p534 = pneg %p533
      $region78: #{tpu_custom_call.1} parent=5 // pred_check_branch
        %536 = sbr.rel (%p534) target = $region80
      $region79: #{tpu_custom_call.1} parent=5 // pred_region
        // Predicated region
        $region81: #{tpu_custom_call.1} parent=79 // pred_check
          %p537 = pneg %p54
        $region82: #{tpu_custom_call.1} parent=79 // pred_check_branch
          %539 = sbr.rel (%p537) target = $region84
        $region83: #{tpu_custom_call.1} parent=79 // pred_region
          %s540 = sand.u32 %s44, 1
          %s541 = scalar_lea.sflag [#allocation3], %s540
          %s542 = sand.u32 %s44, 1
          %s543 = smul.addr %s542, 8
          %s544 = scalar_lea.vmem [#allocation2], %s543
          %546 = vsyncadd %s541, 0
          %s547 = smul.addr %s34, 8
          %s548 = scalar_lea.hbm %s0, %s547
          %s550 = sshll.u32 %s548, 4
          %s551 = int_to_ptr.hbm [resolvable:$true] %s550
          %s552 = sshll.u32 %s544, 4
          %s553 = int_to_ptr.vmem [resolvable:$true] %s552
          %555 = dma.hbm_to_vmem [thread:$0]  %s551, 128, %s553, %s541
        $region84: #{tpu_custom_call.1} parent=79 // pred_fallthru
          _
        // Predicated region
        $region85: #{tpu_custom_call.1} parent=79 // pred_check
          %p556 = pneg %p80
        $region86: #{tpu_custom_call.1} parent=79 // pred_check_branch
          %558 = sbr.rel (%p556) target = $region88
        $region87: #{tpu_custom_call.1} parent=79 // pred_region
          %s559 = sand.u32 %s34, 1
          %s560 = scalar_lea.sflag [#allocation6], %s559
          %s561 = sand.u32 %s70, 1
          %s562 = scalar_lea.vmem [#allocation5], %s561
          %564 = vsyncadd %s560, 0
          %s565 = scalar_lea.hbm %s1, %s34
          %s567 = sshll.u32 %s565, 4
          %s568 = int_to_ptr.hbm [resolvable:$true] %s567
          %s569 = sshll.u32 %s562, 4
          %s570 = int_to_ptr.vmem [resolvable:$true] %s569
          %572 = dma.hbm_to_vmem [thread:$0]  %s568, 16, %s570, %s560
        $region88: #{tpu_custom_call.1} parent=79 // pred_fallthru
          _
      $region80: #{tpu_custom_call.1} parent=5 // pred_fallthru
        _
      %p573 = scmp.le.s32.totalorder 1, %s34
      %p574 = scmp.lt.s32.totalorder %s34, 3
      %p575 = pnand %p573, %p574
      %p576 = pneg %p575
      // Predicated region
      $region89: #{tpu_custom_call.1} parent=5 // pred_check
        _
      $region90: #{tpu_custom_call.1} parent=5 // pred_check_branch
        %578 = sbr.rel (%p575) target = $region92
      $region91: #{tpu_custom_call.1} parent=5 // pred_region
        %s579 = ssub.s32 %s34, 1
        %s580 = sand.u32 %s47, 1
        %s581 = scalar_lea.sflag [#allocation3], %s580
        %s582 = sand.u32 %s47, 1
        %s583 = smul.addr %s582, 8
        %s584 = scalar_lea.vmem [#allocation2], %s583
        // Predicated region
        $region93: #{tpu_custom_call.1} parent=91 // pred_check
          %p585 = pneg %p60
        $region94: #{tpu_custom_call.1} parent=91 // pred_check_branch
          %587 = sbr.rel (%p585) target = $region96
        $region95: #{tpu_custom_call.1} parent=91 // pred_region
          %589 = dma.done %s581, 128
        $region96: #{tpu_custom_call.1} parent=91 // pred_fallthru
          _
        %s590 = sand.u32 %s39, 1
        %s591 = scalar_lea.sflag [#allocation6], %s590
        %s592 = sand.u32 %s73, 1
        %s593 = scalar_lea.vmem [#allocation5], %s592
        // Predicated region
        $region97: #{tpu_custom_call.1} parent=91 // pred_check
          %p594 = pneg %p86
        $region98: #{tpu_custom_call.1} parent=91 // pred_check_branch
          %596 = sbr.rel (%p594) target = $region100
        $region99: #{tpu_custom_call.1} parent=91 // pred_region
          %598 = dma.done %s591, 16
        $region100: #{tpu_custom_call.1} parent=91 // pred_fallthru
          _
        // Predicated region
        $region101: #{tpu_custom_call.1} parent=91 // pred_check
          %p599 = pneg %p233
        $region102: #{tpu_custom_call.1} parent=91 // pred_check_branch
          %601 = sbr.rel (%p599) target = $region104
        $region103: #{tpu_custom_call.1} parent=91 // pred_region
          %603 = dma.done [#allocation6], 512
        $region104: #{tpu_custom_call.1} parent=91 // pred_fallthru
          _
        // Predicated region
        $region105: #{tpu_custom_call.1} parent=91 // pred_check
          %p604 = pneg %p317
        $region106: #{tpu_custom_call.1} parent=91 // pred_check_branch
          %606 = sbr.rel (%p604) target = $region108
        $region107: #{tpu_custom_call.1} parent=91 // pred_region
          %608 = dma.done [#allocation9], 512
        $region108: #{tpu_custom_call.1} parent=91 // pred_fallthru
          _
        %s609 = sand.u32 %s47, 1
        %s610 = scalar_lea.sflag [#allocation3], %s609
        %s611 = sand.u32 %s47, 1
        %s612 = smul.addr %s611, 8
        %s613 = scalar_lea.vmem [#allocation2], %s612
        %p614 = pneg %p60
        %p615 = pneg %p57
        %s616 = sand.u32 %s39, 1
        %s617 = scalar_lea.sflag [#allocation6], %s616
        %s618 = sand.u32 %s73, 1
        %s619 = scalar_lea.vmem [#allocation5], %s618
        %p620 = pneg %p86
        %p621 = pneg %p83
        %p622 = pneg %p107
        %p623 = pneg %p104
        %p624 = pneg %p128
        %p625 = pneg %p125
        %p626 = pneg %p149
        %p627 = pneg %p146
        %p628 = pneg %p170
        %p629 = pneg %p167
        %p630 = pneg %p191
        %p631 = pneg %p188
        %p632 = pneg %p212
        %p633 = pneg %p209
        %p634 = pneg %p233
        %p635 = pneg %p230
        %p636 = pneg %p254
        %p637 = pneg %p251
        %p638 = pneg %p275
        %p639 = pneg %p272
        %p640 = pneg %p296
        %p641 = pneg %p293
        %p642 = pneg %p317
        %p643 = pneg %p314
        %p644 = pneg %p338
        %p645 = pneg %p335
        %p646 = pneg %p359
        %p647 = pneg %p356
        %p648 = pneg %p380
        %p649 = pneg %p377
        %p650 = pneg %p401
        %p651 = pneg %p398
        %p652 = pneg %p422
        %p653 = pneg %p419
        %p654 = pneg %p448
        %p655 = pneg %p445
        %s656 = sand.u32 %s435, 1
        %s657 = scalar_lea.sflag [#allocation4], %s656
        %s658 = sand.u32 %s435, 1
        %s659 = smul.addr %s658, 8
        %s660 = scalar_lea.vmem [#allocation10], %s659
        %v661 = vld [vmem:[%s584] sm:$0xff]
        %v662 = vld [vmem:[%s593] sm:$0x1]
        %v663 = vld [vmem:[%s2] sm:$0xff]
        %v664 = vld [vmem:[%s2 + $0x8] sm:$0xff]
        %v665 = vld [vmem:[%s2 + $0x10] sm:$0xff]
        %v666 = vld [vmem:[%s2 + $0x18] sm:$0xff]
        %v667 = vld [vmem:[%s3] sm:$0x1]
        %v669 = vperm.slane %v667, 0
        %vm671 = vcmask 261120
        %v673 = vsel %vm671, %v661, 0
        %675 = vmatpush.msra.mxu0 0.0
        %676 = vmatpush.msra.mxu0 0.0
        %677 = vmatpush.msra.mxu0 0.0
        %678 = vmatpush.msra.mxu0 0.0
        %679 = vmatpush.msra.mxu0 0.0
        %680 = vmatpush.msra.mxu0 0.0
        %681 = vmatpush.msra.mxu0 0.0
        %682 = vmatpush.msra.mxu0 0.0
        %683 = vmatpush.msra.mxu0 0.0
        %684 = vmatpush.msra.mxu0 0.0
        %685 = vmatpush.msra.mxu0 0.0
        %686 = vmatpush.msra.mxu0 0.0
        %687 = vmatpush.msra.mxu0 %v666
        %688 = vmatpush.msra.mxu0 %v665
        %689 = vmatpush.msra.mxu0 %v664
        %690 = vmatpush.msra.mxu0 %v663
        %691 = vmatmul.f32.gmra.mxu0 %v673
        %v692 = vpop.f32.mrf.mxu0
        %v693 = vadd.f32 %v669, %v692
        %694 = vdwg.mxu0
        %v695 = vld [vmem:[%s4] sm:$0xff]
        %v696 = vld [vmem:[%s4 + $0x8] sm:$0xff]
        %v697 = vld [vmem:[%s4 + $0x10] sm:$0xff]
        %v698 = vld [vmem:[%s4 + $0x18] sm:$0xff]
        %v699 = vld [vmem:[%s5] sm:$0x1]
        %v701 = vperm.slane %v699, 0
        %703 = vmatpush.msra.mxu0 0.0
        %704 = vmatpush.msra.mxu0 0.0
        %705 = vmatpush.msra.mxu0 0.0
        %706 = vmatpush.msra.mxu0 0.0
        %707 = vmatpush.msra.mxu0 0.0
        %708 = vmatpush.msra.mxu0 0.0
        %709 = vmatpush.msra.mxu0 0.0
        %710 = vmatpush.msra.mxu0 0.0
        %711 = vmatpush.msra.mxu0 0.0
        %712 = vmatpush.msra.mxu0 0.0
        %713 = vmatpush.msra.mxu0 0.0
        %714 = vmatpush.msra.mxu0 0.0
        %715 = vmatpush.msra.mxu0 %v698
        %716 = vmatpush.msra.mxu0 %v697
        %717 = vmatpush.msra.mxu0 %v696
        %718 = vmatpush.msra.mxu0 %v695
        %719 = vmatmul.f32.gmra.mxu0 %v673
        %v720 = vpop.f32.mrf.mxu0
        %v721 = vadd.f32 %v701, %v720
        %722 = vdwg.mxu0
        %v723 = vld [vmem:[%s6] sm:$0xff]
        %v724 = vld [vmem:[%s6 + $0x8] sm:$0xff]
        %v725 = vld [vmem:[%s6 + $0x10] sm:$0xff]
        %v726 = vld [vmem:[%s6 + $0x18] sm:$0xff]
        %v727 = vld [vmem:[%s7] sm:$0x1]
        %v729 = vperm.slane %v727, 0
        %731 = vmatpush.msra.mxu0 0.0
        %732 = vmatpush.msra.mxu0 0.0
        %733 = vmatpush.msra.mxu0 0.0
        %734 = vmatpush.msra.mxu0 0.0
        %735 = vmatpush.msra.mxu0 0.0
        %736 = vmatpush.msra.mxu0 0.0
        %737 = vmatpush.msra.mxu0 0.0
        %738 = vmatpush.msra.mxu0 0.0
        %739 = vmatpush.msra.mxu0 0.0
        %740 = vmatpush.msra.mxu0 0.0
        %741 = vmatpush.msra.mxu0 0.0
        %742 = vmatpush.msra.mxu0 0.0
        %743 = vmatpush.msra.mxu0 %v726
        %744 = vmatpush.msra.mxu0 %v725
        %745 = vmatpush.msra.mxu0 %v724
        %746 = vmatpush.msra.mxu0 %v723
        %747 = vmatmul.f32.gmra.mxu0 %v673
        %v748 = vpop.f32.mrf.mxu0
        %v749 = vadd.f32 %v729, %v748
        %750 = vdwg.mxu0
        %vm751 = vcmask 64512
        %v753 = vsel %vm751, %v693, 0
        %v756 = vsel %vm751, %v721, 0
        %758 = vmatpush.xpose.msra.mxu0 0.0
        %759 = vmatpush.xpose.msra.mxu0 0.0
        %760 = vmatpush.xpose.msra.mxu0 0.0
        %761 = vmatpush.xpose.msra.mxu0 0.0
        %762 = vmatpush.xpose.msra.mxu0 0.0
        %763 = vmatpush.xpose.msra.mxu0 0.0
        %764 = vmatpush.xpose.msra.mxu0 0.0
        %765 = vmatpush.xpose.msra.mxu0 0.0
        %766 = vmatpush.xpose.msra.mxu0 0.0
        %767 = vmatpush.xpose.msra.mxu0 0.0
        %768 = vmatpush.xpose.msra.mxu0 0.0
        %769 = vmatpush.xpose.msra.mxu0 0.0
        %770 = vmatpush.xpose.msra.mxu0 0.0
        %771 = vmatpush.xpose.msra.mxu0 0.0
        %772 = vmatpush.xpose.msra.mxu0 0.0
        %773 = vmatpush.xpose.msra.mxu0 %v756
        %774 = vmatmul.f32.gmra.mxu0 %v753
        %v775 = vpop.f32.mrf.mxu0
        %v776 = vadd.f32 0.0, %v775
        %777 = vdwg.mxu0
        %v778 = vmul.f32 %v776, 0.35355338
        %v780 = vperm.slane %v662, 0
        %v782 = vadd.f32 %v778, %v780
        %v783 = vsel %vm751, %v782, -inf
        %784 = vmax.xlane.f32.xlu0 %v783
        %v785 = vpop.xlane.xlu0 %784
        %v786 = vsub.f32 %v782, %v785
        %v787 = vmul.f32 %v786, 1.442695
        %v788 = vpow.pop %v787
        %v789 = vsel %vm751, %v788, 0.0
        %790 = vadd.xlane.f32.xlu0 %v789
        %v791 = vpop.xlane.xlu0 %790
        %v792 = vrcp.pop %v791
        %v793 = vmul.f32 %v791, %v792
        %v794 = vsub.f32 1.0, %v793
        %v795 = vmul.f32 %v792, %v794
        %v796 = vadd.f32 %v792, %v795
        %vm797 = vweird.f32 %v791
        %vm798 = vweird.f32 %v792
        %vm799 = vmor %vm797, %vm798
        %v800 = vsel %vm799, %v792, %v796
        %v801 = vand.u32 2147483647, %v791
        %vm802 = vcmp.eq.f32.partialorder %v801, 8.507059e+37
        %v803 = vand.u32 %v791, 2147483648
        %v804 = vor.u32 1.1754944e-38, %v803
        %v805 = vsel %vm802, %v804, %v800
        %v806 = vmul.f32 %v788, %v805
        %v808 = vsel %vm751, %v806, 0
        %810 = vmatpush.msra.mxu0 0.0
        %811 = vmatpush.msra.mxu0 0.0
        %812 = vmatpush.msra.mxu0 0.0
        %813 = vmatpush.msra.mxu0 0.0
        %814 = vmatpush.msra.mxu0 0.0
        %815 = vmatpush.msra.mxu0 0.0
        %816 = vmatpush.msra.mxu0 0.0
        %817 = vmatpush.msra.mxu0 0.0
        %818 = vmatpush.msra.mxu0 0.0
        %819 = vmatpush.msra.mxu0 0.0
        %820 = vmatpush.msra.mxu0 0.0
        %821 = vmatpush.msra.mxu0 0.0
        %822 = vmatpush.msra.mxu0 0.0
        %823 = vmatpush.msra.mxu0 0.0
        %824 = vmatpush.msra.mxu0 0.0
        %825 = vmatpush.msra.mxu0 %v749
        %826 = vmatmul.f32.gmra.mxu0 %v808
        %v827 = vpop.f32.mrf.mxu0
        %v828 = vadd.f32 0.0, %v827
        %829 = vdwg.mxu0
        %830 = vrot.lane.b32.xlu0 %v693, 120
        %v831 = vpop.permute.xlu0 %830
        %832 = vrot.lane.b32.xlu0 %v721, 120
        %v833 = vpop.permute.xlu0 %832
        %v834 = vsel %vm751, %v831, 0
        %v836 = vsel %vm751, %v833, 0
        %838 = vmatpush.xpose.msra.mxu0 0.0
        %839 = vmatpush.xpose.msra.mxu0 0.0
        %840 = vmatpush.xpose.msra.mxu0 0.0
        %841 = vmatpush.xpose.msra.mxu0 0.0
        %842 = vmatpush.xpose.msra.mxu0 0.0
        %843 = vmatpush.xpose.msra.mxu0 0.0
        %844 = vmatpush.xpose.msra.mxu0 0.0
        %845 = vmatpush.xpose.msra.mxu0 0.0
        %846 = vmatpush.xpose.msra.mxu0 0.0
        %847 = vmatpush.xpose.msra.mxu0 0.0
        %848 = vmatpush.xpose.msra.mxu0 0.0
        %849 = vmatpush.xpose.msra.mxu0 0.0
        %850 = vmatpush.xpose.msra.mxu0 0.0
        %851 = vmatpush.xpose.msra.mxu0 0.0
        %852 = vmatpush.xpose.msra.mxu0 0.0
        %853 = vmatpush.xpose.msra.mxu0 %v836
        %854 = vmatmul.f32.gmra.mxu0 %v834
        %v855 = vpop.f32.mrf.mxu0
        %v856 = vadd.f32 0.0, %v855
        %857 = vdwg.mxu0
        %v858 = vmul.f32 %v856, 0.35355338
        %v859 = vadd.f32 %v858, %v780
        %v860 = vsel %vm751, %v859, -inf
        %861 = vmax.xlane.f32.xlu0 %v860
        %v862 = vpop.xlane.xlu0 %861
        %v863 = vsub.f32 %v859, %v862
        %v864 = vmul.f32 %v863, 1.442695
        %v865 = vpow.pop %v864
        %v866 = vsel %vm751, %v865, 0.0
        %867 = vadd.xlane.f32.xlu0 %v866
        %v868 = vpop.xlane.xlu0 %867
        %v869 = vrcp.pop %v868
        %v870 = vmul.f32 %v868, %v869
        %v871 = vsub.f32 1.0, %v870
        %v872 = vmul.f32 %v869, %v871
        %v873 = vadd.f32 %v869, %v872
        %vm874 = vweird.f32 %v868
        %vm875 = vweird.f32 %v869
        %vm876 = vmor %vm874, %vm875
        %v877 = vsel %vm876, %v869, %v873
        %v878 = vand.u32 2147483647, %v868
        %vm879 = vcmp.eq.f32.partialorder %v878, 8.507059e+37
        %v880 = vand.u32 %v868, 2147483648
        %v881 = vor.u32 1.1754944e-38, %v880
        %v882 = vsel %vm879, %v881, %v877
        %v883 = vmul.f32 %v865, %v882
        %885 = vrot.lane.b32.xlu0 %v749, 120
        %v886 = vpop.permute.xlu0 %885
        %v889 = vsel %vm751, %v883, 0
        %891 = vmatpush.msra.mxu0 0.0
        %892 = vmatpush.msra.mxu0 0.0
        %893 = vmatpush.msra.mxu0 0.0
        %894 = vmatpush.msra.mxu0 0.0
        %895 = vmatpush.msra.mxu0 0.0
        %896 = vmatpush.msra.mxu0 0.0
        %897 = vmatpush.msra.mxu0 0.0
        %898 = vmatpush.msra.mxu0 0.0
        %899 = vmatpush.msra.mxu0 0.0
        %900 = vmatpush.msra.mxu0 0.0
        %901 = vmatpush.msra.mxu0 0.0
        %902 = vmatpush.msra.mxu0 0.0
        %903 = vmatpush.msra.mxu0 0.0
        %904 = vmatpush.msra.mxu0 0.0
        %905 = vmatpush.msra.mxu0 0.0
        %906 = vmatpush.msra.mxu0 %v886
        %907 = vmatmul.f32.gmra.mxu0 %v889
        %v908 = vpop.f32.mrf.mxu0
        %v909 = vadd.f32 0.0, %v908
        %910 = vdwg.mxu0
        %911 = vrot.lane.b32.xlu0 %v693, 112
        %v912 = vpop.permute.xlu0 %911
        %913 = vrot.lane.b32.xlu0 %v721, 112
        %v914 = vpop.permute.xlu0 %913
        %v915 = vsel %vm751, %v912, 0
        %v917 = vsel %vm751, %v914, 0
        %919 = vmatpush.xpose.msra.mxu0 0.0
        %920 = vmatpush.xpose.msra.mxu0 0.0
        %921 = vmatpush.xpose.msra.mxu0 0.0
        %922 = vmatpush.xpose.msra.mxu0 0.0
        %923 = vmatpush.xpose.msra.mxu0 0.0
        %924 = vmatpush.xpose.msra.mxu0 0.0
        %925 = vmatpush.xpose.msra.mxu0 0.0
        %926 = vmatpush.xpose.msra.mxu0 0.0
        %927 = vmatpush.xpose.msra.mxu0 0.0
        %928 = vmatpush.xpose.msra.mxu0 0.0
        %929 = vmatpush.xpose.msra.mxu0 0.0
        %930 = vmatpush.xpose.msra.mxu0 0.0
        %931 = vmatpush.xpose.msra.mxu0 0.0
        %932 = vmatpush.xpose.msra.mxu0 0.0
        %933 = vmatpush.xpose.msra.mxu0 0.0
        %934 = vmatpush.xpose.msra.mxu0 %v917
        %935 = vmatmul.f32.gmra.mxu0 %v915
        %v936 = vpop.f32.mrf.mxu0
        %v937 = vadd.f32 0.0, %v936
        %938 = vdwg.mxu0
        %v939 = vmul.f32 %v937, 0.35355338
        %v940 = vadd.f32 %v939, %v780
        %v941 = vsel %vm751, %v940, -inf
        %942 = vmax.xlane.f32.xlu0 %v941
        %v943 = vpop.xlane.xlu0 %942
        %v944 = vsub.f32 %v940, %v943
        %v945 = vmul.f32 %v944, 1.442695
        %v946 = vpow.pop %v945
        %v947 = vsel %vm751, %v946, 0.0
        %948 = vadd.xlane.f32.xlu0 %v947
        %v949 = vpop.xlane.xlu0 %948
        %v950 = vrcp.pop %v949
        %v951 = vmul.f32 %v949, %v950
        %v952 = vsub.f32 1.0, %v951
        %v953 = vmul.f32 %v950, %v952
        %v954 = vadd.f32 %v950, %v953
        %vm955 = vweird.f32 %v949
        %vm956 = vweird.f32 %v950
        %vm957 = vmor %vm955, %vm956
        %v958 = vsel %vm957, %v950, %v954
        %v959 = vand.u32 2147483647, %v949
        %vm960 = vcmp.eq.f32.partialorder %v959, 8.507059e+37
        %v961 = vand.u32 %v949, 2147483648
        %v962 = vor.u32 1.1754944e-38, %v961
        %v963 = vsel %vm960, %v962, %v958
        %v964 = vmul.f32 %v946, %v963
        %965 = vrot.lane.b32.xlu0 %v749, 112
        %v966 = vpop.permute.xlu0 %965
        %v969 = vsel %vm751, %v964, 0
        %971 = vmatpush.msra.mxu0 0.0
        %972 = vmatpush.msra.mxu0 0.0
        %973 = vmatpush.msra.mxu0 0.0
        %974 = vmatpush.msra.mxu0 0.0
        %975 = vmatpush.msra.mxu0 0.0
        %976 = vmatpush.msra.mxu0 0.0
        %977 = vmatpush.msra.mxu0 0.0
        %978 = vmatpush.msra.mxu0 0.0
        %979 = vmatpush.msra.mxu0 0.0
        %980 = vmatpush.msra.mxu0 0.0
        %981 = vmatpush.msra.mxu0 0.0
        %982 = vmatpush.msra.mxu0 0.0
        %983 = vmatpush.msra.mxu0 0.0
        %984 = vmatpush.msra.mxu0 0.0
        %985 = vmatpush.msra.mxu0 0.0
        %986 = vmatpush.msra.mxu0 %v966
        %987 = vmatmul.f32.gmra.mxu0 %v969
        %v988 = vpop.f32.mrf.mxu0
        %v989 = vadd.f32 0.0, %v988
        %990 = vdwg.mxu0
        %991 = vrot.lane.b32.xlu0 %v693, 104
        %v992 = vpop.permute.xlu0 %991
        %993 = vrot.lane.b32.xlu0 %v721, 104
        %v994 = vpop.permute.xlu0 %993
        %v995 = vsel %vm751, %v992, 0
        %v997 = vsel %vm751, %v994, 0
        %999 = vmatpush.xpose.msra.mxu0 0.0
        %1000 = vmatpush.xpose.msra.mxu0 0.0
        %1001 = vmatpush.xpose.msra.mxu0 0.0
        %1002 = vmatpush.xpose.msra.mxu0 0.0
        %1003 = vmatpush.xpose.msra.mxu0 0.0
        %1004 = vmatpush.xpose.msra.mxu0 0.0
        %1005 = vmatpush.xpose.msra.mxu0 0.0
        %1006 = vmatpush.xpose.msra.mxu0 0.0
        %1007 = vmatpush.xpose.msra.mxu0 0.0
        %1008 = vmatpush.xpose.msra.mxu0 0.0
        %1009 = vmatpush.xpose.msra.mxu0 0.0
        %1010 = vmatpush.xpose.msra.mxu0 0.0
        %1011 = vmatpush.xpose.msra.mxu0 0.0
        %1012 = vmatpush.xpose.msra.mxu0 0.0
        %1013 = vmatpush.xpose.msra.mxu0 0.0
        %1014 = vmatpush.xpose.msra.mxu0 %v997
        %1015 = vmatmul.f32.gmra.mxu0 %v995
        %v1016 = vpop.f32.mrf.mxu0
        %v1017 = vadd.f32 0.0, %v1016
        %1018 = vdwg.mxu0
        %v1019 = vmul.f32 %v1017, 0.35355338
        %v1020 = vadd.f32 %v1019, %v780
        %v1021 = vsel %vm751, %v1020, -inf
        %1022 = vmax.xlane.f32.xlu0 %v1021
        %v1023 = vpop.xlane.xlu0 %1022
        %v1024 = vsub.f32 %v1020, %v1023
        %v1025 = vmul.f32 %v1024, 1.442695
        %v1026 = vpow.pop %v1025
        %v1027 = vsel %vm751, %v1026, 0.0
        %1028 = vadd.xlane.f32.xlu0 %v1027
        %v1029 = vpop.xlane.xlu0 %1028
        %v1030 = vrcp.pop %v1029
        %v1031 = vmul.f32 %v1029, %v1030
        %v1032 = vsub.f32 1.0, %v1031
        %v1033 = vmul.f32 %v1030, %v1032
        %v1034 = vadd.f32 %v1030, %v1033
        %vm1035 = vweird.f32 %v1029
        %vm1036 = vweird.f32 %v1030
        %vm1037 = vmor %vm1035, %vm1036
        %v1038 = vsel %vm1037, %v1030, %v1034
        %v1039 = vand.u32 2147483647, %v1029
        %vm1040 = vcmp.eq.f32.partialorder %v1039, 8.507059e+37
        %v1041 = vand.u32 %v1029, 2147483648
        %v1042 = vor.u32 1.1754944e-38, %v1041
        %v1043 = vsel %vm1040, %v1042, %v1038
        %v1044 = vmul.f32 %v1026, %v1043
        %1045 = vrot.lane.b32.xlu0 %v749, 104
        %v1046 = vpop.permute.xlu0 %1045
        %v1049 = vsel %vm751, %v1044, 0
        %1051 = vmatpush.msra.mxu0 0.0
        %1052 = vmatpush.msra.mxu0 0.0
        %1053 = vmatpush.msra.mxu0 0.0
        %1054 = vmatpush.msra.mxu0 0.0
        %1055 = vmatpush.msra.mxu0 0.0
        %1056 = vmatpush.msra.mxu0 0.0
        %1057 = vmatpush.msra.mxu0 0.0
        %1058 = vmatpush.msra.mxu0 0.0
        %1059 = vmatpush.msra.mxu0 0.0
        %1060 = vmatpush.msra.mxu0 0.0
        %1061 = vmatpush.msra.mxu0 0.0
        %1062 = vmatpush.msra.mxu0 0.0
        %1063 = vmatpush.msra.mxu0 0.0
        %1064 = vmatpush.msra.mxu0 0.0
        %1065 = vmatpush.msra.mxu0 0.0
        %1066 = vmatpush.msra.mxu0 %v1046
        %1067 = vmatmul.f32.gmra.mxu0 %v1049
        %v1068 = vpop.f32.mrf.mxu0
        %v1069 = vadd.f32 0.0, %v1068
        %1070 = vdwg.mxu0
        %1072 = vrot.lane.b32.xlu0 %v909, 8
        %v1073 = vpop.permute.xlu0 %1072
        %1076 = vrot.lane.b32.xlu0 %v989, 16
        %v1077 = vpop.permute.xlu0 %1076
        %1080 = vrot.lane.b32.xlu0 %v1069, 24
        %v1081 = vpop.permute.xlu0 %1080
        %v1083 = vsel %vm751, %v828, %v1073
        %vm1084 = vcmask 130048
        %v1085 = vsel %vm1084, %v1083, %v1077
        %vm1086 = vcmask 195584
        %v1087 = vsel %vm1086, %v1085, %v1081
        %v1088 = vld [vmem:[#allocation7] sm:$0xff]
        %v1089 = vld [vmem:[#allocation7 + $0x8] sm:$0xff]
        %v1090 = vld [vmem:[#allocation7 + $0x10] sm:$0xff]
        %v1091 = vld [vmem:[#allocation7 + $0x18] sm:$0xff]
        %v1092 = vld [vmem:[%s9] sm:$0x1]
        %v1094 = vperm.slane %v1092, 0
        %v1097 = vsel %vm671, %v1087, 0
        %1099 = vmatpush.msra.mxu0 0.0
        %1100 = vmatpush.msra.mxu0 0.0
        %1101 = vmatpush.msra.mxu0 0.0
        %1102 = vmatpush.msra.mxu0 0.0
        %1103 = vmatpush.msra.mxu0 0.0
        %1104 = vmatpush.msra.mxu0 0.0
        %1105 = vmatpush.msra.mxu0 0.0
        %1106 = vmatpush.msra.mxu0 0.0
        %1107 = vmatpush.msra.mxu0 0.0
        %1108 = vmatpush.msra.mxu0 0.0
        %1109 = vmatpush.msra.mxu0 0.0
        %1110 = vmatpush.msra.mxu0 0.0
        %1111 = vmatpush.msra.mxu0 %v1091
        %1112 = vmatpush.msra.mxu0 %v1090
        %1113 = vmatpush.msra.mxu0 %v1089
        %1114 = vmatpush.msra.mxu0 %v1088
        %1115 = vmatmul.f32.gmra.mxu0 %v1097
        %v1116 = vpop.f32.mrf.mxu0
        %v1117 = vadd.f32 %v1094, %v1116
        %1118 = vdwg.mxu0
        %v1119 = vadd.f32 %v1117, %v661
        %v1120 = vld [vmem:[%s10] sm:$0x1]
        %v1121 = vld [vmem:[%s11] sm:$0x1]
        %v1122 = vsel %vm671, %v1119, 0.0
        %1123 = vadd.xlane.f32.xlu0 %v1122
        %v1124 = vpop.xlane.xlu0 %1123
        %v1125 = vrcp.pop 32.0
        %v1126 = vmul.f32 32.0, %v1125
        %v1127 = vsub.f32 1.0, %v1126
        %v1128 = vmul.f32 %v1125, %v1127
        %v1129 = vadd.f32 %v1125, %v1128
        %vm1130 = vweird.f32 %v1125
        %v1131 = vsel %vm1130, %v1125, %v1129
        %v1132 = vmul.f32 %v1124, %v1131
        %v1133 = vsub.f32 %v1119, %v1132
        %v1134 = vmul.f32 %v1133, %v1133
        %v1135 = vsel %vm671, %v1134, 0.0
        %1136 = vadd.xlane.f32.xlu0 %v1135
        %v1137 = vpop.xlane.xlu0 %1136
        %v1138 = vmul.f32 %v1137, %v1131
        %v1139 = vadd.f32 %v1138, 1e-12
        %v1140 = vrsqrt.pop %v1139
        %v1141 = vmul.f32 %v1140, %v1139
        %v1142 = vmul.f32 %v1141, %v1140
        %v1143 = vmul.f32 0.5, %v1142
        %v1144 = vsub.f32 1.5, %v1143
        %v1145 = vmul.f32 %v1140, %v1144
        %vm1146 = vweird.f32 %v1139
        %vm1147 = vweird.f32 %v1140
        %vm1148 = vmor %vm1146, %vm1147
        %v1149 = vsel %vm1148, %v1140, %v1145
        %v1150 = vmul.f32 %v1133, %v1149
        %v1152 = vperm.slane %v1120, 0
        %v1154 = vmul.f32 %v1150, %v1152
        %v1156 = vperm.slane %v1121, 0
        %v1158 = vadd.f32 %v1154, %v1156
        %v1159 = vld [vmem:[#allocation8] sm:$0xff]
        %v1160 = vld [vmem:[#allocation8 + $0x8] sm:$0xff]
        %v1161 = vld [vmem:[#allocation8 + $0x10] sm:$0xff]
        %v1162 = vld [vmem:[#allocation8 + $0x18] sm:$0xff]
        %v1163 = vld [vmem:[%s13] sm:$0x1]
        %v1165 = vperm.slane %v1163, 0
        %v1168 = vsel %vm671, %v1158, 0
        %1170 = vmatpush.msra.mxu0 0.0
        %1171 = vmatpush.msra.mxu0 0.0
        %1172 = vmatpush.msra.mxu0 0.0
        %1173 = vmatpush.msra.mxu0 0.0
        %1174 = vmatpush.msra.mxu0 0.0
        %1175 = vmatpush.msra.mxu0 0.0
        %1176 = vmatpush.msra.mxu0 0.0
        %1177 = vmatpush.msra.mxu0 0.0
        %1178 = vmatpush.msra.mxu0 0.0
        %1179 = vmatpush.msra.mxu0 0.0
        %1180 = vmatpush.msra.mxu0 0.0
        %1181 = vmatpush.msra.mxu0 0.0
        %1182 = vmatpush.msra.mxu0 %v1162
        %1183 = vmatpush.msra.mxu0 %v1161
        %1184 = vmatpush.msra.mxu0 %v1160
        %1185 = vmatpush.msra.mxu0 %v1159
        %1186 = vmatmul.f32.gmra.mxu0 %v1168
        %v1187 = vpop.f32.mrf.mxu0
        %v1188 = vadd.f32 %v1165, %v1187
        %1189 = vdwg.mxu0
        %v1190 = vmul.f32 %v1188, 0.5
        %v1191 = vmul.f32 %v1188, 0.70710677
        %v1192 = vmul.f32 %v1191, %v1191
        %v1193 = vmin.f32 16.0, %v1192
        %v1194 = vmul.f32 %v1193, 2.1237322e-06
        %v1195 = vadd.f32 %v1194, 0.00028619796
        %v1196 = vmul.f32 %v1193, %v1195
        %v1197 = vadd.f32 %v1196, 0.0036580483
        %v1198 = vmul.f32 %v1193, %v1197
        %v1199 = vadd.f32 %v1198, 0.05243302
        %v1200 = vmul.f32 %v1193, %v1199
        %v1201 = vadd.f32 %v1200, 0.18741608
        %v1202 = vmul.f32 %v1193, %v1201
        %v1203 = vadd.f32 %v1202, 1.1283791
        %v1204 = vmul.f32 %v1191, %v1203
        %v1205 = vmul.f32 %v1193, 3.8918573e-05
        %v1206 = vadd.f32 %v1205, 0.001143296
        %v1207 = vmul.f32 %v1193, %v1206
        %v1208 = vadd.f32 %v1207, 0.014752088
        %v1209 = vmul.f32 %v1193, %v1208
        %v1210 = vadd.f32 %v1209, 0.112945676
        %v1211 = vmul.f32 %v1193, %v1210
        %v1212 = vadd.f32 %v1211, 0.4994258
        %v1213 = vmul.f32 %v1193, %v1212
        %v1214 = vadd.f32 %v1213, 1.0
        %v1215 = vrcp.pop %v1214
        %v1216 = vmul.f32 %v1214, %v1215
        %v1217 = vsub.f32 1.0, %v1216
        %v1218 = vmul.f32 %v1215, %v1217
        %v1219 = vadd.f32 %v1215, %v1218
        %vm1220 = vweird.f32 %v1214
        %vm1221 = vweird.f32 %v1215
        %vm1222 = vmor %vm1220, %vm1221
        %v1223 = vsel %vm1222, %v1215, %v1219
        %v1224 = vand.u32 2147483647, %v1214
        %vm1225 = vcmp.eq.f32.partialorder %v1224, 8.507059e+37
        %v1226 = vand.u32 %v1214, 2147483648
        %v1227 = vor.u32 1.1754944e-38, %v1226
        %v1228 = vsel %vm1225, %v1227, %v1223
        %v1229 = vmul.f32 %v1204, %v1228
        %v1230 = vmin.f32 %v1229, 1.0
        %v1231 = vmax.f32 %v1230, -1.0
        %v1232 = vadd.f32 %v1231, 1.0
        %v1233 = vmul.f32 %v1190, %v1232
        %v1234 = vld [vmem:[%s14] sm:$0xff]
        %v1235 = vld [vmem:[%s14 + $0x8] sm:$0xff]
        %v1236 = vld [vmem:[%s14 + $0x10] sm:$0xff]
        %v1237 = vld [vmem:[%s14 + $0x18] sm:$0xff]
        %v1238 = vld [vmem:[%s14 + $0x20] sm:$0xff]
        %v1239 = vld [vmem:[%s14 + $0x28] sm:$0xff]
        %v1240 = vld [vmem:[%s14 + $0x30] sm:$0xff]
        %v1241 = vld [vmem:[%s14 + $0x38] sm:$0xff]
        %v1242 = vld [vmem:[%s15] sm:$0x1]
        %v1244 = vperm.slane %v1242, 0
        %vm1246 = vcmask 523264
        %v1248 = vsel %vm1246, %v1233, 0
        %1250 = vmatpush.msra.mxu0 0.0
        %1251 = vmatpush.msra.mxu0 0.0
        %1252 = vmatpush.msra.mxu0 0.0
        %1253 = vmatpush.msra.mxu0 0.0
        %1254 = vmatpush.msra.mxu0 0.0
        %1255 = vmatpush.msra.mxu0 0.0
        %1256 = vmatpush.msra.mxu0 0.0
        %1257 = vmatpush.msra.mxu0 0.0
        %1258 = vmatpush.msra.mxu0 %v1241
        %1259 = vmatpush.msra.mxu0 %v1240
        %1260 = vmatpush.msra.mxu0 %v1239
        %1261 = vmatpush.msra.mxu0 %v1238
        %1262 = vmatpush.msra.mxu0 %v1237
        %1263 = vmatpush.msra.mxu0 %v1236
        %1264 = vmatpush.msra.mxu0 %v1235
        %1265 = vmatpush.msra.mxu0 %v1234
        %1266 = vmatmul.f32.gmra.mxu0 %v1248
        %v1267 = vpop.f32.mrf.mxu0
        %v1268 = vadd.f32 %v1244, %v1267
        %1269 = vdwg.mxu0
        %v1270 = vadd.f32 %v1268, %v1158
        %v1271 = vld [vmem:[%s16] sm:$0x1]
        %v1272 = vld [vmem:[%s17] sm:$0x1]
        %v1273 = vsel %vm671, %v1270, 0.0
        %1274 = vadd.xlane.f32.xlu0 %v1273
        %v1275 = vpop.xlane.xlu0 %1274
        %v1276 = vmul.f32 %v1275, %v1131
        %v1277 = vsub.f32 %v1270, %v1276
        %v1278 = vmul.f32 %v1277, %v1277
        %v1279 = vsel %vm671, %v1278, 0.0
        %1280 = vadd.xlane.f32.xlu0 %v1279
        %v1281 = vpop.xlane.xlu0 %1280
        %v1282 = vmul.f32 %v1281, %v1131
        %v1283 = vadd.f32 %v1282, 1e-12
        %v1284 = vrsqrt.pop %v1283
        %v1285 = vmul.f32 %v1284, %v1283
        %v1286 = vmul.f32 %v1285, %v1284
        %v1287 = vmul.f32 0.5, %v1286
        %v1288 = vsub.f32 1.5, %v1287
        %v1289 = vmul.f32 %v1284, %v1288
        %vm1290 = vweird.f32 %v1283
        %vm1291 = vweird.f32 %v1284
        %vm1292 = vmor %vm1290, %vm1291
        %v1293 = vsel %vm1292, %v1284, %v1289
        %v1294 = vmul.f32 %v1277, %v1293
        %v1296 = vperm.slane %v1271, 0
        %v1298 = vmul.f32 %v1294, %v1296
        %v1300 = vperm.slane %v1272, 0
        %v1302 = vadd.f32 %v1298, %v1300
        %1303 = vst.msk [vmem:[%s660] sm:$0xff] %vm671, %v1302
        %s1304 = sand.u32 %s435, 1
        %s1305 = scalar_lea.sflag [#allocation4], %s1304
        %s1306 = sand.u32 %s435, 1
        %s1307 = smul.addr %s1306, 8
        %s1308 = scalar_lea.vmem [#allocation10], %s1307
        // Predicated region
        $region109: #{tpu_custom_call.1} parent=91 // pred_check
          %p1309 = pneg %p445
        $region110: #{tpu_custom_call.1} parent=91 // pred_check_branch
          %1311 = sbr.rel (%p1309) target = $region112
        $region111: #{tpu_custom_call.1} parent=91 // pred_region
          %1313 = vsyncadd %s1305, 0
          %s1314 = smul.addr %s39, 8
          %s1315 = scalar_lea.hbm %s18, %s1314
          %s1317 = sshll.u32 %s1308, 4
          %s1318 = int_to_ptr.vmem [resolvable:$true] %s1317
          %s1319 = sshll.u32 %s1315, 4
          %s1320 = int_to_ptr.hbm [resolvable:$true] %s1319
          %1322 = dma.vmem_to_hbm [thread:$0]  %s1318, 128, %s1320, %s1305
        $region112: #{tpu_custom_call.1} parent=91 // pred_fallthru
          _
      $region92: #{tpu_custom_call.1} parent=5 // pred_fallthru
        _
      %p1323 = scmp.le.s32.totalorder 2, %s34
      // Predicated region
      $region113: #{tpu_custom_call.1} parent=5 // pred_check
        %p1324 = pneg %p1323
      $region114: #{tpu_custom_call.1} parent=5 // pred_check_branch
        %1326 = sbr.rel (%p1324) target = $region116
      $region115: #{tpu_custom_call.1} parent=5 // pred_region
        %s1327 = ssub.s32 %s34, 2
        // Predicated region
        $region117: #{tpu_custom_call.1} parent=115 // pred_check
          %p1328 = pneg %p451
        $region118: #{tpu_custom_call.1} parent=115 // pred_check_branch
          %1330 = sbr.rel (%p1328) target = $region120
        $region119: #{tpu_custom_call.1} parent=115 // pred_region
          %s1331 = sand.u32 %s436, 1
          %s1332 = scalar_lea.sflag [#allocation4], %s1331
          %s1333 = sand.u32 %s436, 1
          %s1334 = smul.addr %s1333, 8
          %s1335 = scalar_lea.vmem [#allocation10], %s1334
          %1337 = dma.done %s1332, 128
        $region120: #{tpu_custom_call.1} parent=115 // pred_fallthru
          _
      $region116: #{tpu_custom_call.1} parent=5 // pred_fallthru
        _
    $region6: #{tpu_custom_call.1} parent=1 // loop_footer
      %s38 = sadd.s32 1, %s34
    $region7: #{tpu_custom_call.1} parent=1 // loop_footer_branch
      %33 = sbr.rel target = $region3
    $region8: #{tpu_custom_call.1} parent=1 // loop_exit
      _
    %1338 = vsyncpa [#allocation3], 1
    %s1339 = scalar_lea.sflag [#allocation3], 1
    %1340 = vsyncpa %s1339, 1
    %1341 = vsyncpa [#allocation6], 1
    %s1342 = scalar_lea.sflag [#allocation6], 1
    %1343 = vsyncpa %s1342, 1
    %1344 = vsyncpa [#allocation9], 1
    %1345 = vsyncpa [#allocation4], 1
    %s1346 = scalar_lea.sflag [#allocation4], 1
    %1347 = vsyncpa %s1346, 1

</llo_original>
